<compile_context>
chip_gen: v5e
topology: v5e:2x2
jax: 0.10.0
libtpu: 0.0.40
codegen_flags: <defaults>
</compile_context>

<pallas_src>
import functools

import jax
import jax.numpy as jnp
from jax.experimental import pallas as pl
from jax.experimental.pallas import tpu as pltpu

SELU_ALPHA = 1.6732632423543772
SELU_SCALE = 1.0507009873554805
BN_EPS = 1e-5

K1_RAW = 23 * 30 * 4          # conv1 im2col contraction size (2760)
K1_PAD = 2816                 # 22 * 128, lane-aligned

# ---- packed f32 parameter-slab layout (row offsets 8-aligned, 128 lanes) ----
_R_B1, _R_W2A, _R_W2B, _R_B2 = 0, 8, 16, 24
_R_W3F = 32                   # 4 conv3 taps x 8 rows -> rows 32..63
_R_BF, _R_LW2, _R_LB2 = 64, 72, 88
_R_LW3, _R_LB3 = 96, 112
_SLAB_ROWS, _SLAB_COLS = 120, 128


def _round_up(x, m):
    return (x + m - 1) // m * m


def _selu(y):
    # one transcendental per element; negative branch = alpha*(exp(y)-1)
    return SELU_SCALE * jnp.where(y > 0.0, y, SELU_ALPHA * (jnp.exp(y) - 1.0))


# -----------------------------------------------------------------------------
# Fused kernel (one batch block per grid step):
#   conv1(+BN2 folded)+SELU -> conv2(+BN3 folded)+SELU -> conv3 folded into
#   lin1 + ReLU -> lin2 + ReLU -> lin3 -> softmax.
# All intermediates stay in VMEM/vregs; parameters come from one bf16 weight
# matrix (conv1) plus one packed f32 slab.
# -----------------------------------------------------------------------------
def fused_kernel(p_ref, w1_ref, slab_ref, o_ref):
    f32 = jnp.float32
    nb, n_out = o_ref.shape

    # tiny parameters: static slices of one packed slab (single DMA)
    b1 = slab_ref[_R_B1:_R_B1 + 1, 0:4]
    w2a = slab_ref[_R_W2A:_R_W2A + 4, 0:8]
    w2b = slab_ref[_R_W2B:_R_W2B + 4, 0:8]
    b2 = slab_ref[_R_B2:_R_B2 + 1, 0:8]
    bf = slab_ref[_R_BF:_R_BF + 1, 0:16]
    lw2 = slab_ref[_R_LW2:_R_LW2 + 16, 0:16]
    lb2 = slab_ref[_R_LB2:_R_LB2 + 1, 0:16]
    lw3 = slab_ref[_R_LW3:_R_LW3 + 16, 0:n_out]
    lb3 = slab_ref[_R_LB3:_R_LB3 + 1, 0:n_out]

    # conv1 (+BN2 folded) + SELU — ONE MXU matmul over all 8 patch groups.
    # patch row = g*nb + n, with g = j*4 + (h2*2 + w2), j = conv2 kw-tap.
    y1 = _selu(jnp.dot(p_ref[...], w1_ref[...],
                       preferred_element_type=f32) + b1)             # (8nb, 4)

    # conv2 (1x2, stride 2; BN3 folded) + SELU: sum over the two kw taps.
    a0, a1 = y1[:4 * nb], y1[4 * nb:]
    y2 = _selu(jnp.dot(a0, w2a, preferred_element_type=f32)
               + jnp.dot(a1, w2b, preferred_element_type=f32) + b2)  # (4nb, 8)

    # conv3 folded into lin1 (no activation between them).  y2 rows are
    # tap-major, so tap t is the STATIC slice y2[t*nb:(t+1)*nb] (no sel3).
    acc = jnp.zeros((nb, 16), f32)
    for t in range(4):
        w3f_t = slab_ref[_R_W3F + 8 * t:_R_W3F + 8 * (t + 1), 0:16]
        acc = acc + jnp.dot(y2[t * nb:(t + 1) * nb], w3f_t,
                            preferred_element_type=f32)
    h = jnp.maximum(acc + bf, 0.0)                                   # lin1+ReLU

    h = jnp.maximum(jnp.dot(h, lw2, preferred_element_type=f32) + lb2, 0.0)
    logits = jnp.dot(h, lw3, preferred_element_type=f32) + lb3

    # softmax(dim=1), numerically stable; EXACT divide so rows sum to 1.
    m = jnp.max(logits, axis=-1, keepdims=True)
    e = jnp.exp(logits - m)
    o_ref[...] = e / jnp.sum(e, axis=-1, keepdims=True)


# -----------------------------------------------------------------------------
# Parameter folding / packing (done once, off the per-call critical path)
# -----------------------------------------------------------------------------
def fold_bn(bn):
    scale = bn["gamma"] / jnp.sqrt(bn["var"] + BN_EPS)
    shift = bn["beta"] - bn["mean"] * scale
    return scale, shift


def prepare_inference_params(params):
    s1, sh1 = fold_bn(params["bn1"])       # conv1 input channels (4,)
    s2, sh2 = fold_bn(params["bn2"])       # conv1 output channels (4,)
    s3, sh3 = fold_bn(params["bn3"])       # conv2 output channels (8,)

    # conv1: (Cout,Cin,kh,kw) -> (kh*kw*Cin, Cout); BN2 folded output-side.
    # BN1 is applied to the data in the wrapper (so PyTorch's zero padding,
    # which happens AFTER BatchNorm, is plain zero padding here).
    w1 = jnp.transpose(params["conv1_w"], (2, 3, 1, 0))           # (kh,kw,ci,co)
    w1_mat = (w1 * s2[None, None, None, :]).reshape(K1_RAW, -1)
    w1_mat = jnp.pad(w1_mat, ((0, K1_PAD - K1_RAW), (0, 0))).astype(jnp.bfloat16)
    b1_eff = (params["conv1_b"] * s2 + sh2).reshape(1, -1)

    # conv2: per kw-tap (Cin,Cout), BN3 folded output-side.
    w2_0 = params["conv2_w"][:, :, 0, 0].T * s3[None, :]
    w2_1 = params["conv2_w"][:, :, 0, 1].T * s3[None, :]
    b2_eff = (params["conv2_b"] * s3 + sh3).reshape(1, -1)

    # conv3 folded into lin1 (linear maps compose; no activation in between).
    lw1 = params["lin1_w"].T                                      # (32, 16)
    w3f = [params["conv3_w"][:, :, t // 2, t % 2].T @ lw1 for t in range(4)]
    bf = params["conv3_b"].reshape(1, -1) @ lw1 + params["lin1_b"].reshape(1, -1)

    lw2 = params["lin2_w"].T
    lb2 = params["lin2_b"].reshape(1, -1)
    lw3 = params["lin3_w"].T
    lb3 = params["lin3_b"].reshape(1, -1)
    out_size = int(lw3.shape[1])
    assert out_size <= _SLAB_COLS, "out_size must fit in one 128-lane slab"

    # Pack every tiny f32 parameter into ONE (120,128) slab -> single DMA.
    slab = jnp.zeros((_SLAB_ROWS, _SLAB_COLS), jnp.float32)

    def put(s, r, a):
        a = jnp.asarray(a, jnp.float32)
        return s.at[r:r + a.shape[0], :a.shape[1]].set(a)

    slab = put(slab, _R_B1, b1_eff)
    slab = put(slab, _R_W2A, w2_0)
    slab = put(slab, _R_W2B, w2_1)
    slab = put(slab, _R_B2, b2_eff)
    for t in range(4):
        slab = put(slab, _R_W3F + 8 * t, w3f[t])
    slab = put(slab, _R_BF, bf)
    slab = put(slab, _R_LW2, lw2)
    slab = put(slab, _R_LB2, lb2)
    slab = put(slab, _R_LW3, lw3)
    slab = put(slab, _R_LB3, lb3)

    return dict(w1=w1_mat, slab=slab, bn1_scale=s1, bn1_shift=sh1,
                out_size=out_size)


def init_params(key, out_size):
    ks = jax.random.split(key, 15)

    def bn_params(k, c):
        k1, k2, k3, k4 = jax.random.split(k, 4)
        return dict(
            gamma=1.0 + 0.1 * jax.random.normal(k1, (c,), jnp.float32),
            beta=0.05 * jax.random.normal(k2, (c,), jnp.float32),
            mean=0.1 * jax.random.normal(k3, (c,), jnp.float32),
            var=jax.random.uniform(k4, (c,), jnp.float32, 0.5, 1.5),
        )

    p = {}
    p["bn1"] = bn_params(ks[0], 4)
    p["conv1_w"] = 0.05 * jax.random.normal(ks[1], (4, 4, 23, 30), jnp.float32)
    p["conv1_b"] = 0.05 * jax.random.normal(ks[2], (4,), jnp.float32)
    p["bn2"] = bn_params(ks[3], 4)
    p["conv2_w"] = 0.1 * jax.random.normal(ks[4], (8, 4, 1, 2), jnp.float32)
    p["conv2_b"] = 0.05 * jax.random.normal(ks[5], (8,), jnp.float32)
    p["bn3"] = bn_params(ks[6], 8)
    p["conv3_w"] = 0.1 * jax.random.normal(ks[7], (32, 8, 2, 2), jnp.float32)
    p["conv3_b"] = 0.05 * jax.random.normal(ks[8], (32,), jnp.float32)
    # PyTorch Linear weight is (out, in); kernel uses (in, out).
    p["lin1_w"] = 0.2 * jax.random.normal(ks[9], (16, 32), jnp.float32)
    p["lin1_b"] = 0.05 * jax.random.normal(ks[10], (16,), jnp.float32)
    p["lin2_w"] = 0.2 * jax.random.normal(ks[11], (16, 16), jnp.float32)
    p["lin2_b"] = 0.05 * jax.random.normal(ks[12], (16,), jnp.float32)
    p["lin3_w"] = 0.2 * jax.random.normal(ks[13], (out_size, 16), jnp.float32)
    p["lin3_b"] = 0.05 * jax.random.normal(ks[14], (out_size,), jnp.float32)
    return p


# -----------------------------------------------------------------------------
# Forward pass
# -----------------------------------------------------------------------------
def forward(x_nchw, prep):
    return _forward_impl(x_nchw, prep["w1"], prep["slab"], prep["bn1_scale"],
                         prep["bn1_shift"], prep["out_size"])


@functools.partial(jax.jit, static_argnums=(5,))
def _forward_impl(x_nchw, w1, slab, s1, sh1, out_size):
    x = jnp.transpose(x_nchw, (0, 2, 3, 1)).astype(jnp.float32)   # NHWC
    N, H, W, C = x.shape
    assert C == 4, "activity_recognizer expects 4 input channels"

    # conv shape arithmetic (static) — must reduce to 1x1 before Flatten.
    H1 = (H + 10 - 23) // 4 + 1
    W1 = (W + 10 - 30) // 25 + 1
    H2 = (H1 - 1) // 2 + 1
    W2 = (W1 - 2) // 2 + 1
    assert H2 == 2 and W2 == 2, "input spatial size must reduce to 1x1 at Flatten"

    # Batch blocking: NB=128 keeps the double-buffered patch block well inside
    # v5e/v6e/v7x VMEM budgets while the patch DMA (the real bottleneck) stays
    # fully pipelined behind the conv1 matmul.
    NB = min(128, _round_up(N, 8))
    N_pad = _round_up(N, NB)
    nblk = N_pad // NB

    # BN1 (eval mode) as one fused elementwise pass, then cast to bf16 BEFORE
    # padding / slicing.  Zero padding here matches PyTorch (pad after BN).
    xb = (x * s1 + sh1).astype(jnp.bfloat16)
    if N_pad != N:
        xb = jnp.pad(xb, ((0, N_pad - N), (0, 0), (0, 0), (0, 0)))
    xp = jnp.pad(xb, ((0, 0), (5, 5), (5, 5), (0, 0)))

    # conv1 im2col with static strided slices only, restricted to the 8 patches
    # per sample that downstream consumes (conv2's stride 2 skips conv1's
    # middle output row).  Group order g = j*4 + (h2*2 + w2): conv2 kw-tap j
    # outermost, then conv3 tap t = h2*2+w2, so conv3 taps become static,
    # contiguous row slices inside the kernel.
    rows = []
    for j in range(2):
        for h2 in range(2):
            for w2 in range(2):
                ho, wo = 2 * h2, 2 * w2 + j
                blk = xp[:, ho * 4:ho * 4 + 23, wo * 25:wo * 25 + 30, :]
                rows.append(blk.reshape(N_pad, K1_RAW))
    p = jnp.stack(rows, axis=0)                                   # (8, N_pad, 2760)
    p = jnp.pad(p, ((0, 0), (0, 0), (0, K1_PAD - K1_RAW)))
    # Interleave by batch block so grid step i gets rows [i*8*NB, (i+1)*8*NB).
    patches = (p.reshape(8, nblk, NB, K1_PAD)
                .transpose(1, 0, 2, 3)
                .reshape(nblk * 8 * NB, K1_PAD))                  # bf16

    # VMEM budget: double-buffered patch block + weights + lane-padded temps.
    patch_block_bytes = 8 * NB * K1_PAD * 2
    vmem_limit = (2 * patch_block_bytes
                  + 2 * K1_PAD * 128 * 2
                  + 2 * _SLAB_ROWS * _SLAB_COLS * 4
                  + 2 * NB * 128 * 4
                  + 16 * NB * 128 * 4
                  + (8 << 20))
    vmem_limit = int(min(max(vmem_limit, 32 << 20), 100 << 20))

    out_pad = pl.pallas_call(
        fused_kernel,
        out_shape=jax.ShapeDtypeStruct((N_pad, out_size), jnp.float32),
        grid=(nblk,),
        in_specs=[
            pl.BlockSpec((8 * NB, K1_PAD), lambda i: (i, 0)),     # patches
            pl.BlockSpec((K1_PAD, 4), lambda i: (0, 0)),          # conv1 weights
            pl.BlockSpec((_SLAB_ROWS, _SLAB_COLS), lambda i: (0, 0)),  # slab
        ],
        out_specs=pl.BlockSpec((NB, out_size), lambda i: (i, 0)),
        compiler_params=pltpu.CompilerParams(
            dimension_semantics=("parallel",),
            vmem_limit_bytes=vmem_limit),
    )(patches, w1, slab)
    return out_pad[:N]


# -----------------------------------------------------------------------------
# Pure-JAX f32 reference (mirrors the PyTorch module in eval mode)
# -----------------------------------------------------------------------------
def _im2col_ref(x, kh, kw, sh, sw):
    N, H, W, C = x.shape
    Ho = (H - kh) // sh + 1
    Wo = (W - kw) // sw + 1
    hi = jnp.arange(Ho)[:, None] * sh + jnp.arange(kh)[None, :]
    wi = jnp.arange(Wo)[:, None] * sw + jnp.arange(kw)[None, :]
    p = x[:, hi, :, :][:, :, :, wi, :]
    p = jnp.transpose(p, (0, 1, 3, 2, 4, 5))
    return p.reshape(N * Ho * Wo, kh * kw * C), (Ho, Wo)


def _reorder_ref(w):
    Cout, Cin, kh, kw = w.shape
    return jnp.transpose(w, (2, 3, 1, 0)).reshape(kh * kw * Cin, Cout)


def reference_forward(x_nchw, params):
    selu = lambda y: SELU_SCALE * jnp.where(y > 0, y, SELU_ALPHA * jnp.expm1(y))
    x = jnp.transpose(x_nchw, (0, 2, 3, 1)).astype(jnp.float32)
    N = x.shape[0]
    s1, sh1 = fold_bn(params["bn1"])
    x = x * s1 + sh1
    xp = jnp.pad(x, ((0, 0), (5, 5), (5, 5), (0, 0)))
    p1, (H1, W1) = _im2col_ref(xp, 23, 30, 4, 25)
    s2, sh2 = fold_bn(params["bn2"])
    y1 = p1 @ _reorder_ref(params["conv1_w"]) + params["conv1_b"]
    y1 = selu(y1 * s2 + sh2).reshape(N, H1, W1, 4)
    p2, (H2, W2) = _im2col_ref(y1, 1, 2, 2, 2)
    s3, sh3 = fold_bn(params["bn3"])
    y2 = p2 @ _reorder_ref(params["conv2_w"]) + params["conv2_b"]
    y2 = selu(y2 * s3 + sh3).reshape(N, H2, W2, 8)
    p3, _ = _im2col_ref(y2, 2, 2, 1, 1)
    feat = p3 @ _reorder_ref(params["conv3_w"]) + params["conv3_b"]   # (N, 32)
    h = jnp.maximum(feat @ params["lin1_w"].T + params["lin1_b"], 0.0)
    h = jnp.maximum(h @ params["lin2_w"].T + params["lin2_b"], 0.0)
    logits = h @ params["lin3_w"].T + params["lin3_b"]
    e = jnp.exp(logits - logits.max(axis=1, keepdims=True))
    return e / e.sum(axis=1, keepdims=True)


if __name__ == "__main__":
    out_size = 10
    N, C, H, W = 2, 4, 22, 100   # smallest-ish spatial size that reduces to 1x1

    key = jax.random.PRNGKey(0)
    k_x, k_p = jax.random.split(key)
    x = jax.random.normal(k_x, (N, C, H, W), dtype=jnp.float32)
    params = init_params(k_p, out_size)
    prep = prepare_inference_params(params)

    out = jax.block_until_ready(forward(x, prep))
    ref = reference_forward(x, params)

    assert out.shape == (N, out_size)
    assert bool(jnp.all(jnp.isfinite(out)))
    # exact softmax divide -> rows sum to 1 within f32 rounding
    assert bool(jnp.allclose(jnp.sum(out, axis=1), 1.0, atol=1e-5))
    # vs f32 reference (bf16 conv1 MXU operands in the kernel => loose tol)
    assert bool(jnp.allclose(out, ref, atol=5e-2)), float(jnp.max(jnp.abs(out - ref)))
    print("KERNEL_OK")
</pallas_src>

<mosaic_0001>
module attributes {stable_mosaic.version = 11 : i64} {
  func.func @fused_kernel(%arg0: i32, %arg1: memref<64x2816xbf16, #tpu.memory_space<vmem>>, %arg2: memref<2816x4xbf16, #tpu.memory_space<vmem>>, %arg3: memref<120x128xf32, #tpu.memory_space<vmem>>, %arg4: memref<8x10xf32, #tpu.memory_space<vmem>>) attributes {dimension_semantics = [#tpu.dimension_semantics<parallel>], iteration_bounds = array<i64: 1>, scalar_prefetch = 0 : i64, scratch_operands = 0 : i64, tpu.core_type = #tpu.core_type<tc>, window_params = [{transform_indices = @transform_0, window_bounds = array<i64: 64, 2816>}, {pipeline_mode = #tpu.pipeline_mode<synchronous>, transform_indices = @transform_1, window_bounds = array<i64: 2816, 4>}, {pipeline_mode = #tpu.pipeline_mode<synchronous>, transform_indices = @transform_2, window_bounds = array<i64: 120, 128>}, {transform_indices = @transform_3, window_bounds = array<i64: 8, 10>}]} {
    %c0 = arith.constant 0 : index
    %c0_0 = arith.constant 0 : index
    %0 = vector.load %arg3[%c0, %c0_0] : memref<120x128xf32, #tpu.memory_space<vmem>>, vector<1x4xf32>
    %c8 = arith.constant 8 : index
    %c0_1 = arith.constant 0 : index
    %1 = vector.load %arg3[%c8, %c0_1] : memref<120x128xf32, #tpu.memory_space<vmem>>, vector<4x8xf32>
    %c16 = arith.constant 16 : index
    %c0_2 = arith.constant 0 : index
    %2 = vector.load %arg3[%c16, %c0_2] : memref<120x128xf32, #tpu.memory_space<vmem>>, vector<4x8xf32>
    %c24 = arith.constant 24 : index
    %c0_3 = arith.constant 0 : index
    %3 = vector.load %arg3[%c24, %c0_3] : memref<120x128xf32, #tpu.memory_space<vmem>>, vector<1x8xf32>
    %c64 = arith.constant 64 : index
    %c0_4 = arith.constant 0 : index
    %4 = vector.load %arg3[%c64, %c0_4] : memref<120x128xf32, #tpu.memory_space<vmem>>, vector<1x16xf32>
    %c72 = arith.constant 72 : index
    %c0_5 = arith.constant 0 : index
    %5 = vector.load %arg3[%c72, %c0_5] : memref<120x128xf32, #tpu.memory_space<vmem>>, vector<16x16xf32>
    %c88 = arith.constant 88 : index
    %c0_6 = arith.constant 0 : index
    %6 = vector.load %arg3[%c88, %c0_6] : memref<120x128xf32, #tpu.memory_space<vmem>>, vector<1x16xf32>
    %c96 = arith.constant 96 : index
    %c0_7 = arith.constant 0 : index
    %7 = vector.load %arg3[%c96, %c0_7] : memref<120x128xf32, #tpu.memory_space<vmem>>, vector<16x10xf32>
    %c112 = arith.constant 112 : index
    %c0_8 = arith.constant 0 : index
    %8 = vector.load %arg3[%c112, %c0_8] : memref<120x128xf32, #tpu.memory_space<vmem>>, vector<1x10xf32>
    %c0_9 = arith.constant 0 : index
    %c0_10 = arith.constant 0 : index
    %9 = vector.load %arg1[%c0_9, %c0_10] : memref<64x2816xbf16, #tpu.memory_space<vmem>>, vector<64x2816xbf16>
    %c0_11 = arith.constant 0 : index
    %c0_12 = arith.constant 0 : index
    %10 = vector.load %arg2[%c0_11, %c0_12] : memref<2816x4xbf16, #tpu.memory_space<vmem>>, vector<2816x4xbf16>
    %cst = arith.constant dense<0.000000e+00> : vector<64x4xf32>
    %11 = tpu.matmul %9, %10, %cst {dimension_numbers = #tpu.dot_dimension_numbers<[1], [0], [0], [1], [0, 0, 1, 1], [], []>} : vector<64x2816xbf16>, vector<2816x4xbf16>, vector<64x4xf32> -> vector<64x4xf32>
    %12 = vector.broadcast %0 : vector<1x4xf32> to vector<64x4xf32>
    %13 = arith.addf %11, %12 : vector<64x4xf32>
    %cst_13 = arith.constant 0.000000e+00 : f32
    %14 = vector.broadcast %cst_13 : f32 to vector<64x4xf32>
    %15 = arith.cmpf ogt, %13, %14 : vector<64x4xf32>
    %16 = math.exp %13 : vector<64x4xf32>
    %cst_14 = arith.constant 1.000000e+00 : f32
    %17 = vector.broadcast %cst_14 : f32 to vector<64x4xf32>
    %18 = arith.subf %16, %17 : vector<64x4xf32>
    %cst_15 = arith.constant 1.67326319 : f32
    %19 = vector.broadcast %cst_15 : f32 to vector<64x4xf32>
    %20 = arith.mulf %19, %18 : vector<64x4xf32>
    %21 = arith.select %15, %13, %20 : vector<64x4xi1>, vector<64x4xf32>
    %cst_16 = arith.constant 1.05070102 : f32
    %22 = vector.broadcast %cst_16 : f32 to vector<64x4xf32>
    %23 = arith.mulf %22, %21 : vector<64x4xf32>
    %24 = vector.extract_strided_slice %23 {offsets = [0, 0], sizes = [32, 4], strides = [1, 1]} : vector<64x4xf32> to vector<32x4xf32>
    %25 = vector.extract_strided_slice %23 {offsets = [32, 0], sizes = [32, 4], strides = [1, 1]} : vector<64x4xf32> to vector<32x4xf32>
    %cst_17 = arith.constant dense<0.000000e+00> : vector<32x8xf32>
    %26 = tpu.matmul %24, %1, %cst_17 {dimension_numbers = #tpu.dot_dimension_numbers<[1], [0], [0], [1], [0, 0, 1, 1], [], []>} : vector<32x4xf32>, vector<4x8xf32>, vector<32x8xf32> -> vector<32x8xf32>
    %cst_18 = arith.constant dense<0.000000e+00> : vector<32x8xf32>
    %27 = tpu.matmul %25, %2, %cst_18 {dimension_numbers = #tpu.dot_dimension_numbers<[1], [0], [0], [1], [0, 0, 1, 1], [], []>} : vector<32x4xf32>, vector<4x8xf32>, vector<32x8xf32> -> vector<32x8xf32>
    %28 = arith.addf %26, %27 : vector<32x8xf32>
    %29 = vector.broadcast %3 : vector<1x8xf32> to vector<32x8xf32>
    %30 = arith.addf %28, %29 : vector<32x8xf32>
    %cst_19 = arith.constant 0.000000e+00 : f32
    %31 = vector.broadcast %cst_19 : f32 to vector<32x8xf32>
    %32 = arith.cmpf ogt, %30, %31 : vector<32x8xf32>
    %33 = math.exp %30 : vector<32x8xf32>
    %cst_20 = arith.constant 1.000000e+00 : f32
    %34 = vector.broadcast %cst_20 : f32 to vector<32x8xf32>
    %35 = arith.subf %33, %34 : vector<32x8xf32>
    %cst_21 = arith.constant 1.67326319 : f32
    %36 = vector.broadcast %cst_21 : f32 to vector<32x8xf32>
    %37 = arith.mulf %36, %35 : vector<32x8xf32>
    %38 = arith.select %32, %30, %37 : vector<32x8xi1>, vector<32x8xf32>
    %cst_22 = arith.constant 1.05070102 : f32
    %39 = vector.broadcast %cst_22 : f32 to vector<32x8xf32>
    %40 = arith.mulf %39, %38 : vector<32x8xf32>
    %cst_23 = arith.constant 0.000000e+00 : f32
    %41 = vector.broadcast %cst_23 : f32 to vector<8x16xf32>
    %c32 = arith.constant 32 : index
    %c0_24 = arith.constant 0 : index
    %42 = vector.load %arg3[%c32, %c0_24] : memref<120x128xf32, #tpu.memory_space<vmem>>, vector<8x16xf32>
    %43 = vector.extract_strided_slice %40 {offsets = [0, 0], sizes = [8, 8], strides = [1, 1]} : vector<32x8xf32> to vector<8x8xf32>
    %cst_25 = arith.constant dense<0.000000e+00> : vector<8x16xf32>
    %44 = tpu.matmul %43, %42, %cst_25 {dimension_numbers = #tpu.dot_dimension_numbers<[1], [0], [0], [1], [0, 0, 1, 1], [], []>} : vector<8x8xf32>, vector<8x16xf32>, vector<8x16xf32> -> vector<8x16xf32>
    %45 = arith.addf %41, %44 : vector<8x16xf32>
    %c40 = arith.constant 40 : index
    %c0_26 = arith.constant 0 : index
    %46 = vector.load %arg3[%c40, %c0_26] : memref<120x128xf32, #tpu.memory_space<vmem>>, vector<8x16xf32>
    %47 = vector.extract_strided_slice %40 {offsets = [8, 0], sizes = [8, 8], strides = [1, 1]} : vector<32x8xf32> to vector<8x8xf32>
    %cst_27 = arith.constant dense<0.000000e+00> : vector<8x16xf32>
    %48 = tpu.matmul %47, %46, %cst_27 {dimension_numbers = #tpu.dot_dimension_numbers<[1], [0], [0], [1], [0, 0, 1, 1], [], []>} : vector<8x8xf32>, vector<8x16xf32>, vector<8x16xf32> -> vector<8x16xf32>
    %49 = arith.addf %45, %48 : vector<8x16xf32>
    %c48 = arith.constant 48 : index
    %c0_28 = arith.constant 0 : index
    %50 = vector.load %arg3[%c48, %c0_28] : memref<120x128xf32, #tpu.memory_space<vmem>>, vector<8x16xf32>
    %51 = vector.extract_strided_slice %40 {offsets = [16, 0], sizes = [8, 8], strides = [1, 1]} : vector<32x8xf32> to vector<8x8xf32>
    %cst_29 = arith.constant dense<0.000000e+00> : vector<8x16xf32>
    %52 = tpu.matmul %51, %50, %cst_29 {dimension_numbers = #tpu.dot_dimension_numbers<[1], [0], [0], [1], [0, 0, 1, 1], [], []>} : vector<8x8xf32>, vector<8x16xf32>, vector<8x16xf32> -> vector<8x16xf32>
    %53 = arith.addf %49, %52 : vector<8x16xf32>
    %c56 = arith.constant 56 : index
    %c0_30 = arith.constant 0 : index
    %54 = vector.load %arg3[%c56, %c0_30] : memref<120x128xf32, #tpu.memory_space<vmem>>, vector<8x16xf32>
    %55 = vector.extract_strided_slice %40 {offsets = [24, 0], sizes = [8, 8], strides = [1, 1]} : vector<32x8xf32> to vector<8x8xf32>
    %cst_31 = arith.constant dense<0.000000e+00> : vector<8x16xf32>
    %56 = tpu.matmul %55, %54, %cst_31 {dimension_numbers = #tpu.dot_dimension_numbers<[1], [0], [0], [1], [0, 0, 1, 1], [], []>} : vector<8x8xf32>, vector<8x16xf32>, vector<8x16xf32> -> vector<8x16xf32>
    %57 = arith.addf %53, %56 : vector<8x16xf32>
    %58 = vector.broadcast %4 : vector<1x16xf32> to vector<8x16xf32>
    %59 = arith.addf %57, %58 : vector<8x16xf32>
    %cst_32 = arith.constant 0.000000e+00 : f32
    %60 = vector.broadcast %cst_32 : f32 to vector<8x16xf32>
    %61 = arith.maximumf %59, %60 : vector<8x16xf32>
    %cst_33 = arith.constant dense<0.000000e+00> : vector<8x16xf32>
    %62 = tpu.matmul %61, %5, %cst_33 {dimension_numbers = #tpu.dot_dimension_numbers<[1], [0], [0], [1], [0, 0, 1, 1], [], []>} : vector<8x16xf32>, vector<16x16xf32>, vector<8x16xf32> -> vector<8x16xf32>
    %63 = vector.broadcast %6 : vector<1x16xf32> to vector<8x16xf32>
    %64 = arith.addf %62, %63 : vector<8x16xf32>
    %cst_34 = arith.constant 0.000000e+00 : f32
    %65 = vector.broadcast %cst_34 : f32 to vector<8x16xf32>
    %66 = arith.maximumf %64, %65 : vector<8x16xf32>
    %cst_35 = arith.constant dense<0.000000e+00> : vector<8x10xf32>
    %67 = tpu.matmul %66, %7, %cst_35 {dimension_numbers = #tpu.dot_dimension_numbers<[1], [0], [0], [1], [0, 0, 1, 1], [], []>} : vector<8x16xf32>, vector<16x10xf32>, vector<8x10xf32> -> vector<8x10xf32>
    %68 = vector.broadcast %8 : vector<1x10xf32> to vector<8x10xf32>
    %69 = arith.addf %67, %68 : vector<8x10xf32>
    %cst_36 = arith.constant dense<0xFF800000> : vector<8xf32>
    %70 = vector.multi_reduction <maximumf>, %69, %cst_36 [1] : vector<8x10xf32> to vector<8xf32>
    %71 = vector.shape_cast %70 : vector<8xf32> to vector<8x1xf32>
    %72 = vector.broadcast %71 : vector<8x1xf32> to vector<8x10xf32>
    %73 = arith.subf %69, %72 : vector<8x10xf32>
    %74 = math.exp %73 : vector<8x10xf32>
    %cst_37 = arith.constant dense<0.000000e+00> : vector<8xf32>
    %75 = vector.multi_reduction <add>, %74, %cst_37 [1] : vector<8x10xf32> to vector<8xf32>
    %76 = vector.shape_cast %75 : vector<8xf32> to vector<8x1xf32>
    %77 = vector.broadcast %76 : vector<8x1xf32> to vector<8x10xf32>
    %78 = arith.divf %74, %77 : vector<8x10xf32>
    %c0_38 = arith.constant 0 : index
    %c0_39 = arith.constant 0 : index
    %79 = vector.load %arg4[%c0_38, %c0_39] : memref<8x10xf32, #tpu.memory_space<vmem>>, vector<8x10xf32>
    tpu.vector_store %arg4[%c0_38, %c0_39], %78 {strides = array<i32>} : memref<8x10xf32, #tpu.memory_space<vmem>>, vector<8x10xf32>,
    return
  }
  func.func @transform_0(%arg0: i32) -> (i32, i32) {
    %c0_i32 = arith.constant 0 : i32
    %c0_i32_0 = arith.constant 0 : i32
    return %arg0, %c0_i32 : i32, i32
  }
  func.func @transform_1(%arg0: i32) -> (i32, i32) {
    %c0_i32 = arith.constant 0 : i32
    %c0_i32_0 = arith.constant 0 : i32
    %c0_i32_1 = arith.constant 0 : i32
    return %c0_i32, %c0_i32_0 : i32, i32
  }
  func.func @transform_2(%arg0: i32) -> (i32, i32) {
    %c0_i32 = arith.constant 0 : i32
    %c0_i32_0 = arith.constant 0 : i32
    %c0_i32_1 = arith.constant 0 : i32
    return %c0_i32, %c0_i32_0 : i32, i32
  }
  func.func @transform_3(%arg0: i32) -> (i32, i32) {
    %c0_i32 = arith.constant 0 : i32
    %c0_i32_0 = arith.constant 0 : i32
    return %arg0, %c0_i32 : i32, i32
  }
}

</mosaic_0001>

<llo_original>
// kernel: _forward_impl.1
$region0: #{_forward_impl.1}
  #allocation0 [shape = 'u32[]', space=smem, size = 0x4, offset = 0x4, fixed_abs, tag = 'smem constant byte address 0x4 - core index']
  #allocation1 [shape = 'u32[72,128]{1,0:T(1,128)}', space=vmem, size = 0x9000, scoped, tag = 'internal scratch']
  %s0 = inlined_call_operand.vmem [shape: bf16[64,2816], index: 0, kind: input, shape index: {}]
  %s1 = inlined_call_operand.vmem [shape: bf16[2816,4], index: 1, kind: input, shape index: {}]
  %s2 = inlined_call_operand.vmem [shape: f32[120,128], index: 2, kind: input, shape index: {}]
  %s3 = inlined_call_operand.vmem [shape: f32[8,10], index: 3, kind: output, shape index: {}]
  %s4 = sld [smem:[#allocation0]]
  $region22: #{_forward_impl.1} parent=0
    _
  %s6 = ssub.s32 1, %s4
  %s7 = scalar_select 0, %s6, %s4
  // Predicated region
  $region2: #{_forward_impl.1} parent=0 // pred_check
    _
  $region3: #{_forward_impl.1} parent=0 // pred_check_branch
    %9 = sbr.rel (0) target = $region5
  $region4: #{_forward_impl.1} parent=0 // pred_region
    _
  $region5: #{_forward_impl.1} parent=0 // pred_fallthru
    _
  // Predicated region
  $region6: #{_forward_impl.1} parent=0 // pred_check
    _
  $region7: #{_forward_impl.1} parent=0 // pred_check_branch
    %11 = sbr.rel (0) target = $region9
  $region8: #{_forward_impl.1} parent=0 // pred_region
    _
  $region9: #{_forward_impl.1} parent=0 // pred_fallthru
    _
  // Predicated region
  $region10: #{_forward_impl.1} parent=0 // pred_check
    _
  $region11: #{_forward_impl.1} parent=0 // pred_check_branch
    %13 = sbr.rel (0) target = $region13
  $region12: #{_forward_impl.1} parent=0 // pred_region
    _
  $region13: #{_forward_impl.1} parent=0 // pred_fallthru
    _
  %v14 = vld [vmem:[%s2] sm:$0x1]
  %v15 = vld [vmem:[%s2 + $0x8] sm:$0xf]
  %v16 = vld [vmem:[%s2 + $0x10] sm:$0xf]
  %v17 = vld [vmem:[%s2 + $0x18] sm:$0x1]
  %v18 = vld [vmem:[%s2 + $0x40] sm:$0x1]
  %v19 = vld [vmem:[%s2 + $0x48] sm:$0xff]
  %v20 = vld [vmem:[%s2 + $0x50] sm:$0xff]
  %v21 = vld [vmem:[%s2 + $0x58] sm:$0x1]
  %v22 = vld [vmem:[%s2 + $0x60] sm:$0xff]
  %v23 = vld [vmem:[%s2 + $0x68] sm:$0xff]
  %v24 = vld [vmem:[%s2 + $0x70] sm:$0x1]
  %v25 = vld [vmem:[%s0] sm:$0xff]
  %v26 = vld [vmem:[%s0 + $0x8] sm:$0xff]
  %v27 = vld [vmem:[%s0 + $0x10] sm:$0xff]
  %v28 = vld [vmem:[%s0 + $0x18] sm:$0xff]
  %v29 = vld [vmem:[%s0 + $0x20] sm:$0xff]
  %v30 = vld [vmem:[%s0 + $0x28] sm:$0xff]
  %v31 = vld [vmem:[%s0 + $0x30] sm:$0xff]
  %v32 = vld [vmem:[%s0 + $0x38] sm:$0xff]
  %v33 = vld [vmem:[%s0 + $0x40] sm:$0xff]
  %v34 = vld [vmem:[%s0 + $0x48] sm:$0xff]
  %v35 = vld [vmem:[%s0 + $0x50] sm:$0xff]
  %v36 = vld [vmem:[%s0 + $0x58] sm:$0xff]
  %v37 = vld [vmem:[%s0 + $0x60] sm:$0xff]
  %v38 = vld [vmem:[%s0 + $0x68] sm:$0xff]
  %v39 = vld [vmem:[%s0 + $0x70] sm:$0xff]
  %v40 = vld [vmem:[%s0 + $0x78] sm:$0xff]
  %v41 = vld [vmem:[%s0 + $0x80] sm:$0xff]
  %v42 = vld [vmem:[%s0 + $0x88] sm:$0xff]
  %v43 = vld [vmem:[%s0 + $0x90] sm:$0xff]
  %v44 = vld [vmem:[%s0 + $0x98] sm:$0xff]
  %v45 = vld [vmem:[%s0 + $0xa0] sm:$0xff]
  %v46 = vld [vmem:[%s0 + $0xa8] sm:$0xff]
  %v47 = vld [vmem:[%s0 + $0xb0] sm:$0xff]
  %v48 = vld [vmem:[%s0 + $0xb8] sm:$0xff]
  %v49 = vld [vmem:[%s0 + $0xc0] sm:$0xff]
  %v50 = vld [vmem:[%s0 + $0xc8] sm:$0xff]
  %v51 = vld [vmem:[%s0 + $0xd0] sm:$0xff]
  %v52 = vld [vmem:[%s0 + $0xd8] sm:$0xff]
  %v53 = vld [vmem:[%s0 + $0xe0] sm:$0xff]
  %v54 = vld [vmem:[%s0 + $0xe8] sm:$0xff]
  %v55 = vld [vmem:[%s0 + $0xf0] sm:$0xff]
  %v56 = vld [vmem:[%s0 + $0xf8] sm:$0xff]
  %v57 = vld [vmem:[%s0 + $0x100] sm:$0xff]
  %v58 = vld [vmem:[%s0 + $0x108] sm:$0xff]
  %v59 = vld [vmem:[%s0 + $0x110] sm:$0xff]
  %v60 = vld [vmem:[%s0 + $0x118] sm:$0xff]
  %v61 = vld [vmem:[%s0 + $0x120] sm:$0xff]
  %v62 = vld [vmem:[%s0 + $0x128] sm:$0xff]
  %v63 = vld [vmem:[%s0 + $0x130] sm:$0xff]
  %v64 = vld [vmem:[%s0 + $0x138] sm:$0xff]
  %v65 = vld [vmem:[%s0 + $0x140] sm:$0xff]
  %v66 = vld [vmem:[%s0 + $0x148] sm:$0xff]
  %v67 = vld [vmem:[%s0 + $0x150] sm:$0xff]
  %v68 = vld [vmem:[%s0 + $0x158] sm:$0xff]
  %v69 = vld [vmem:[%s0 + $0x160] sm:$0xff]
  %v70 = vld [vmem:[%s0 + $0x168] sm:$0xff]
  %v71 = vld [vmem:[%s0 + $0x170] sm:$0xff]
  %v72 = vld [vmem:[%s0 + $0x178] sm:$0xff]
  %v73 = vld [vmem:[%s0 + $0x180] sm:$0xff]
  %v74 = vld [vmem:[%s0 + $0x188] sm:$0xff]
  %v75 = vld [vmem:[%s0 + $0x190] sm:$0xff]
  %v76 = vld [vmem:[%s0 + $0x198] sm:$0xff]
  %v77 = vld [vmem:[%s0 + $0x1a0] sm:$0xff]
  %v78 = vld [vmem:[%s0 + $0x1a8] sm:$0xff]
  %v79 = vld [vmem:[%s0 + $0x1b0] sm:$0xff]
  %v80 = vld [vmem:[%s0 + $0x1b8] sm:$0xff]
  %v81 = vld [vmem:[%s0 + $0x1c0] sm:$0xff]
  %v82 = vld [vmem:[%s0 + $0x1c8] sm:$0xff]
  %v83 = vld [vmem:[%s0 + $0x1d0] sm:$0xff]
  %v84 = vld [vmem:[%s0 + $0x1d8] sm:$0xff]
  %v85 = vld [vmem:[%s0 + $0x1e0] sm:$0xff]
  %v86 = vld [vmem:[%s0 + $0x1e8] sm:$0xff]
  %v87 = vld [vmem:[%s0 + $0x1f0] sm:$0xff]
  %v88 = vld [vmem:[%s0 + $0x1f8] sm:$0xff]
  %v89 = vld [vmem:[%s0 + $0x200] sm:$0xff]
  %v90 = vld [vmem:[%s0 + $0x208] sm:$0xff]
  %v91 = vld [vmem:[%s0 + $0x210] sm:$0xff]
  %v92 = vld [vmem:[%s0 + $0x218] sm:$0xff]
  %v93 = vld [vmem:[%s0 + $0x220] sm:$0xff]
  %v94 = vld [vmem:[%s0 + $0x228] sm:$0xff]
  %v95 = vld [vmem:[%s0 + $0x230] sm:$0xff]
  %v96 = vld [vmem:[%s0 + $0x238] sm:$0xff]
  %v97 = vld [vmem:[%s0 + $0x240] sm:$0xff]
  %v98 = vld [vmem:[%s0 + $0x248] sm:$0xff]
  %v99 = vld [vmem:[%s0 + $0x250] sm:$0xff]
  %v100 = vld [vmem:[%s0 + $0x258] sm:$0xff]
  %v101 = vld [vmem:[%s0 + $0x260] sm:$0xff]
  %v102 = vld [vmem:[%s0 + $0x268] sm:$0xff]
  %v103 = vld [vmem:[%s0 + $0x270] sm:$0xff]
  %v104 = vld [vmem:[%s0 + $0x278] sm:$0xff]
  %v105 = vld [vmem:[%s0 + $0x280] sm:$0xff]
  %v106 = vld [vmem:[%s0 + $0x288] sm:$0xff]
  %v107 = vld [vmem:[%s0 + $0x290] sm:$0xff]
  %v108 = vld [vmem:[%s0 + $0x298] sm:$0xff]
  %v109 = vld [vmem:[%s0 + $0x2a0] sm:$0xff]
  %v110 = vld [vmem:[%s0 + $0x2a8] sm:$0xff]
  %v111 = vld [vmem:[%s0 + $0x2b0] sm:$0xff]
  %v112 = vld [vmem:[%s0 + $0x2b8] sm:$0xff]
  %v113 = vld [vmem:[%s1] sm:$0xf]
  %v114 = vld [vmem:[%s1 + $0x4] sm:$0xf]
  %v115 = vld [vmem:[%s1 + $0x8] sm:$0xf]
  %v116 = vld [vmem:[%s1 + $0xc] sm:$0xf]
  %v117 = vld [vmem:[%s1 + $0x10] sm:$0xf]
  %v118 = vld [vmem:[%s1 + $0x14] sm:$0xf]
  %v119 = vld [vmem:[%s1 + $0x18] sm:$0xf]
  %v120 = vld [vmem:[%s1 + $0x1c] sm:$0xf]
  %v121 = vld [vmem:[%s1 + $0x20] sm:$0xf]
  %v122 = vld [vmem:[%s1 + $0x24] sm:$0xf]
  %v123 = vld [vmem:[%s1 + $0x28] sm:$0xf]
  %v124 = vld [vmem:[%s1 + $0x2c] sm:$0xf]
  %v125 = vld [vmem:[%s1 + $0x30] sm:$0xf]
  %v126 = vld [vmem:[%s1 + $0x34] sm:$0xf]
  %v127 = vld [vmem:[%s1 + $0x38] sm:$0xf]
  %v128 = vld [vmem:[%s1 + $0x3c] sm:$0xf]
  %v129 = vld [vmem:[%s1 + $0x40] sm:$0xf]
  %v130 = vld [vmem:[%s1 + $0x44] sm:$0xf]
  %v131 = vld [vmem:[%s1 + $0x48] sm:$0xf]
  %v132 = vld [vmem:[%s1 + $0x4c] sm:$0xf]
  %v133 = vld [vmem:[%s1 + $0x50] sm:$0xf]
  %v134 = vld [vmem:[%s1 + $0x54] sm:$0xf]
  %v135 = vld [vmem:[%s1 + $0x58] sm:$0xf]
  %v136 = vld [vmem:[%s1 + $0x5c] sm:$0xf]
  %v137 = vld [vmem:[%s1 + $0x60] sm:$0xf]
  %v138 = vld [vmem:[%s1 + $0x64] sm:$0xf]
  %v139 = vld [vmem:[%s1 + $0x68] sm:$0xf]
  %v140 = vld [vmem:[%s1 + $0x6c] sm:$0xf]
  %v141 = vld [vmem:[%s1 + $0x70] sm:$0xf]
  %v142 = vld [vmem:[%s1 + $0x74] sm:$0xf]
  %v143 = vld [vmem:[%s1 + $0x78] sm:$0xf]
  %v144 = vld [vmem:[%s1 + $0x7c] sm:$0xf]
  %v145 = vld [vmem:[%s1 + $0x80] sm:$0xf]
  %v146 = vld [vmem:[%s1 + $0x84] sm:$0xf]
  %v147 = vld [vmem:[%s1 + $0x88] sm:$0xf]
  %v148 = vld [vmem:[%s1 + $0x8c] sm:$0xf]
  %v149 = vld [vmem:[%s1 + $0x90] sm:$0xf]
  %v150 = vld [vmem:[%s1 + $0x94] sm:$0xf]
  %v151 = vld [vmem:[%s1 + $0x98] sm:$0xf]
  %v152 = vld [vmem:[%s1 + $0x9c] sm:$0xf]
  %v153 = vld [vmem:[%s1 + $0xa0] sm:$0xf]
  %v154 = vld [vmem:[%s1 + $0xa4] sm:$0xf]
  %v155 = vld [vmem:[%s1 + $0xa8] sm:$0xf]
  %v156 = vld [vmem:[%s1 + $0xac] sm:$0xf]
  %v157 = vld [vmem:[%s1 + $0xb0] sm:$0xf]
  %v158 = vld [vmem:[%s1 + $0xb4] sm:$0xf]
  %v159 = vld [vmem:[%s1 + $0xb8] sm:$0xf]
  %v160 = vld [vmem:[%s1 + $0xbc] sm:$0xf]
  %v161 = vld [vmem:[%s1 + $0xc0] sm:$0xf]
  %v162 = vld [vmem:[%s1 + $0xc4] sm:$0xf]
  %v163 = vld [vmem:[%s1 + $0xc8] sm:$0xf]
  %v164 = vld [vmem:[%s1 + $0xcc] sm:$0xf]
  %v165 = vld [vmem:[%s1 + $0xd0] sm:$0xf]
  %v166 = vld [vmem:[%s1 + $0xd4] sm:$0xf]
  %v167 = vld [vmem:[%s1 + $0xd8] sm:$0xf]
  %v168 = vld [vmem:[%s1 + $0xdc] sm:$0xf]
  %v169 = vld [vmem:[%s1 + $0xe0] sm:$0xf]
  %v170 = vld [vmem:[%s1 + $0xe4] sm:$0xf]
  %v171 = vld [vmem:[%s1 + $0xe8] sm:$0xf]
  %v172 = vld [vmem:[%s1 + $0xec] sm:$0xf]
  %v173 = vld [vmem:[%s1 + $0xf0] sm:$0xf]
  %v174 = vld [vmem:[%s1 + $0xf4] sm:$0xf]
  %v175 = vld [vmem:[%s1 + $0xf8] sm:$0xf]
  %v176 = vld [vmem:[%s1 + $0xfc] sm:$0xf]
  %v177 = vld [vmem:[%s1 + $0x100] sm:$0xf]
  %v178 = vld [vmem:[%s1 + $0x104] sm:$0xf]
  %v179 = vld [vmem:[%s1 + $0x108] sm:$0xf]
  %v180 = vld [vmem:[%s1 + $0x10c] sm:$0xf]
  %v181 = vld [vmem:[%s1 + $0x110] sm:$0xf]
  %v182 = vld [vmem:[%s1 + $0x114] sm:$0xf]
  %v183 = vld [vmem:[%s1 + $0x118] sm:$0xf]
  %v184 = vld [vmem:[%s1 + $0x11c] sm:$0xf]
  %v185 = vld [vmem:[%s1 + $0x120] sm:$0xf]
  %v186 = vld [vmem:[%s1 + $0x124] sm:$0xf]
  %v187 = vld [vmem:[%s1 + $0x128] sm:$0xf]
  %v188 = vld [vmem:[%s1 + $0x12c] sm:$0xf]
  %v189 = vld [vmem:[%s1 + $0x130] sm:$0xf]
  %v190 = vld [vmem:[%s1 + $0x134] sm:$0xf]
  %v191 = vld [vmem:[%s1 + $0x138] sm:$0xf]
  %v192 = vld [vmem:[%s1 + $0x13c] sm:$0xf]
  %v193 = vld [vmem:[%s1 + $0x140] sm:$0xf]
  %v194 = vld [vmem:[%s1 + $0x144] sm:$0xf]
  %v195 = vld [vmem:[%s1 + $0x148] sm:$0xf]
  %v196 = vld [vmem:[%s1 + $0x14c] sm:$0xf]
  %v197 = vld [vmem:[%s1 + $0x150] sm:$0xf]
  %v198 = vld [vmem:[%s1 + $0x154] sm:$0xf]
  %v199 = vld [vmem:[%s1 + $0x158] sm:$0xf]
  %v200 = vld [vmem:[%s1 + $0x15c] sm:$0xf]
  %v201 = vld [vmem:[%s1 + $0x160] sm:$0xf]
  %v202 = vld [vmem:[%s1 + $0x164] sm:$0xf]
  %v203 = vld [vmem:[%s1 + $0x168] sm:$0xf]
  %v204 = vld [vmem:[%s1 + $0x16c] sm:$0xf]
  %v205 = vld [vmem:[%s1 + $0x170] sm:$0xf]
  %v206 = vld [vmem:[%s1 + $0x174] sm:$0xf]
  %v207 = vld [vmem:[%s1 + $0x178] sm:$0xf]
  %v208 = vld [vmem:[%s1 + $0x17c] sm:$0xf]
  %v209 = vld [vmem:[%s1 + $0x180] sm:$0xf]
  %v210 = vld [vmem:[%s1 + $0x184] sm:$0xf]
  %v211 = vld [vmem:[%s1 + $0x188] sm:$0xf]
  %v212 = vld [vmem:[%s1 + $0x18c] sm:$0xf]
  %v213 = vld [vmem:[%s1 + $0x190] sm:$0xf]
  %v214 = vld [vmem:[%s1 + $0x194] sm:$0xf]
  %v215 = vld [vmem:[%s1 + $0x198] sm:$0xf]
  %v216 = vld [vmem:[%s1 + $0x19c] sm:$0xf]
  %v217 = vld [vmem:[%s1 + $0x1a0] sm:$0xf]
  %v218 = vld [vmem:[%s1 + $0x1a4] sm:$0xf]
  %v219 = vld [vmem:[%s1 + $0x1a8] sm:$0xf]
  %v220 = vld [vmem:[%s1 + $0x1ac] sm:$0xf]
  %v221 = vld [vmem:[%s1 + $0x1b0] sm:$0xf]
  %v222 = vld [vmem:[%s1 + $0x1b4] sm:$0xf]
  %v223 = vld [vmem:[%s1 + $0x1b8] sm:$0xf]
  %v224 = vld [vmem:[%s1 + $0x1bc] sm:$0xf]
  %v225 = vld [vmem:[%s1 + $0x1c0] sm:$0xf]
  %v226 = vld [vmem:[%s1 + $0x1c4] sm:$0xf]
  %v227 = vld [vmem:[%s1 + $0x1c8] sm:$0xf]
  %v228 = vld [vmem:[%s1 + $0x1cc] sm:$0xf]
  %v229 = vld [vmem:[%s1 + $0x1d0] sm:$0xf]
  %v230 = vld [vmem:[%s1 + $0x1d4] sm:$0xf]
  %v231 = vld [vmem:[%s1 + $0x1d8] sm:$0xf]
  %v232 = vld [vmem:[%s1 + $0x1dc] sm:$0xf]
  %v233 = vld [vmem:[%s1 + $0x1e0] sm:$0xf]
  %v234 = vld [vmem:[%s1 + $0x1e4] sm:$0xf]
  %v235 = vld [vmem:[%s1 + $0x1e8] sm:$0xf]
  %v236 = vld [vmem:[%s1 + $0x1ec] sm:$0xf]
  %v237 = vld [vmem:[%s1 + $0x1f0] sm:$0xf]
  %v238 = vld [vmem:[%s1 + $0x1f4] sm:$0xf]
  %v239 = vld [vmem:[%s1 + $0x1f8] sm:$0xf]
  %v240 = vld [vmem:[%s1 + $0x1fc] sm:$0xf]
  %v241 = vld [vmem:[%s1 + $0x200] sm:$0xf]
  %v242 = vld [vmem:[%s1 + $0x204] sm:$0xf]
  %v243 = vld [vmem:[%s1 + $0x208] sm:$0xf]
  %v244 = vld [vmem:[%s1 + $0x20c] sm:$0xf]
  %v245 = vld [vmem:[%s1 + $0x210] sm:$0xf]
  %v246 = vld [vmem:[%s1 + $0x214] sm:$0xf]
  %v247 = vld [vmem:[%s1 + $0x218] sm:$0xf]
  %v248 = vld [vmem:[%s1 + $0x21c] sm:$0xf]
  %v249 = vld [vmem:[%s1 + $0x220] sm:$0xf]
  %v250 = vld [vmem:[%s1 + $0x224] sm:$0xf]
  %v251 = vld [vmem:[%s1 + $0x228] sm:$0xf]
  %v252 = vld [vmem:[%s1 + $0x22c] sm:$0xf]
  %v253 = vld [vmem:[%s1 + $0x230] sm:$0xf]
  %v254 = vld [vmem:[%s1 + $0x234] sm:$0xf]
  %v255 = vld [vmem:[%s1 + $0x238] sm:$0xf]
  %v256 = vld [vmem:[%s1 + $0x23c] sm:$0xf]
  %v257 = vld [vmem:[%s1 + $0x240] sm:$0xf]
  %v258 = vld [vmem:[%s1 + $0x244] sm:$0xf]
  %v259 = vld [vmem:[%s1 + $0x248] sm:$0xf]
  %v260 = vld [vmem:[%s1 + $0x24c] sm:$0xf]
  %v261 = vld [vmem:[%s1 + $0x250] sm:$0xf]
  %v262 = vld [vmem:[%s1 + $0x254] sm:$0xf]
  %v263 = vld [vmem:[%s1 + $0x258] sm:$0xf]
  %v264 = vld [vmem:[%s1 + $0x25c] sm:$0xf]
  %v265 = vld [vmem:[%s1 + $0x260] sm:$0xf]
  %v266 = vld [vmem:[%s1 + $0x264] sm:$0xf]
  %v267 = vld [vmem:[%s1 + $0x268] sm:$0xf]
  %v268 = vld [vmem:[%s1 + $0x26c] sm:$0xf]
  %v269 = vld [vmem:[%s1 + $0x270] sm:$0xf]
  %v270 = vld [vmem:[%s1 + $0x274] sm:$0xf]
  %v271 = vld [vmem:[%s1 + $0x278] sm:$0xf]
  %v272 = vld [vmem:[%s1 + $0x27c] sm:$0xf]
  %v273 = vld [vmem:[%s1 + $0x280] sm:$0xf]
  %v274 = vld [vmem:[%s1 + $0x284] sm:$0xf]
  %v275 = vld [vmem:[%s1 + $0x288] sm:$0xf]
  %v276 = vld [vmem:[%s1 + $0x28c] sm:$0xf]
  %v277 = vld [vmem:[%s1 + $0x290] sm:$0xf]
  %v278 = vld [vmem:[%s1 + $0x294] sm:$0xf]
  %v279 = vld [vmem:[%s1 + $0x298] sm:$0xf]
  %v280 = vld [vmem:[%s1 + $0x29c] sm:$0xf]
  %v281 = vld [vmem:[%s1 + $0x2a0] sm:$0xf]
  %v282 = vld [vmem:[%s1 + $0x2a4] sm:$0xf]
  %v283 = vld [vmem:[%s1 + $0x2a8] sm:$0xf]
  %v284 = vld [vmem:[%s1 + $0x2ac] sm:$0xf]
  %v285 = vld [vmem:[%s1 + $0x2b0] sm:$0xf]
  %v286 = vld [vmem:[%s1 + $0x2b4] sm:$0xf]
  %v287 = vld [vmem:[%s1 + $0x2b8] sm:$0xf]
  %v288 = vld [vmem:[%s1 + $0x2bc] sm:$0xf]
  %v289 = vld [vmem:[%s1 + $0x2c0] sm:$0xf]
  %v290 = vld [vmem:[%s1 + $0x2c4] sm:$0xf]
  %v291 = vld [vmem:[%s1 + $0x2c8] sm:$0xf]
  %v292 = vld [vmem:[%s1 + $0x2cc] sm:$0xf]
  %v293 = vld [vmem:[%s1 + $0x2d0] sm:$0xf]
  %v294 = vld [vmem:[%s1 + $0x2d4] sm:$0xf]
  %v295 = vld [vmem:[%s1 + $0x2d8] sm:$0xf]
  %v296 = vld [vmem:[%s1 + $0x2dc] sm:$0xf]
  %v297 = vld [vmem:[%s1 + $0x2e0] sm:$0xf]
  %v298 = vld [vmem:[%s1 + $0x2e4] sm:$0xf]
  %v299 = vld [vmem:[%s1 + $0x2e8] sm:$0xf]
  %v300 = vld [vmem:[%s1 + $0x2ec] sm:$0xf]
  %v301 = vld [vmem:[%s1 + $0x2f0] sm:$0xf]
  %v302 = vld [vmem:[%s1 + $0x2f4] sm:$0xf]
  %v303 = vld [vmem:[%s1 + $0x2f8] sm:$0xf]
  %v304 = vld [vmem:[%s1 + $0x2fc] sm:$0xf]
  %v305 = vld [vmem:[%s1 + $0x300] sm:$0xf]
  %v306 = vld [vmem:[%s1 + $0x304] sm:$0xf]
  %v307 = vld [vmem:[%s1 + $0x308] sm:$0xf]
  %v308 = vld [vmem:[%s1 + $0x30c] sm:$0xf]
  %v309 = vld [vmem:[%s1 + $0x310] sm:$0xf]
  %v310 = vld [vmem:[%s1 + $0x314] sm:$0xf]
  %v311 = vld [vmem:[%s1 + $0x318] sm:$0xf]
  %v312 = vld [vmem:[%s1 + $0x31c] sm:$0xf]
  %v313 = vld [vmem:[%s1 + $0x320] sm:$0xf]
  %v314 = vld [vmem:[%s1 + $0x324] sm:$0xf]
  %v315 = vld [vmem:[%s1 + $0x328] sm:$0xf]
  %v316 = vld [vmem:[%s1 + $0x32c] sm:$0xf]
  %v317 = vld [vmem:[%s1 + $0x330] sm:$0xf]
  %v318 = vld [vmem:[%s1 + $0x334] sm:$0xf]
  %v319 = vld [vmem:[%s1 + $0x338] sm:$0xf]
  %v320 = vld [vmem:[%s1 + $0x33c] sm:$0xf]
  %v321 = vld [vmem:[%s1 + $0x340] sm:$0xf]
  %v322 = vld [vmem:[%s1 + $0x344] sm:$0xf]
  %v323 = vld [vmem:[%s1 + $0x348] sm:$0xf]
  %v324 = vld [vmem:[%s1 + $0x34c] sm:$0xf]
  %v325 = vld [vmem:[%s1 + $0x350] sm:$0xf]
  %v326 = vld [vmem:[%s1 + $0x354] sm:$0xf]
  %v327 = vld [vmem:[%s1 + $0x358] sm:$0xf]
  %v328 = vld [vmem:[%s1 + $0x35c] sm:$0xf]
  %v329 = vld [vmem:[%s1 + $0x360] sm:$0xf]
  %v330 = vld [vmem:[%s1 + $0x364] sm:$0xf]
  %v331 = vld [vmem:[%s1 + $0x368] sm:$0xf]
  %v332 = vld [vmem:[%s1 + $0x36c] sm:$0xf]
  %v333 = vld [vmem:[%s1 + $0x370] sm:$0xf]
  %v334 = vld [vmem:[%s1 + $0x374] sm:$0xf]
  %v335 = vld [vmem:[%s1 + $0x378] sm:$0xf]
  %v336 = vld [vmem:[%s1 + $0x37c] sm:$0xf]
  %v337 = vld [vmem:[%s1 + $0x380] sm:$0xf]
  %v338 = vld [vmem:[%s1 + $0x384] sm:$0xf]
  %v339 = vld [vmem:[%s1 + $0x388] sm:$0xf]
  %v340 = vld [vmem:[%s1 + $0x38c] sm:$0xf]
  %v341 = vld [vmem:[%s1 + $0x390] sm:$0xf]
  %v342 = vld [vmem:[%s1 + $0x394] sm:$0xf]
  %v343 = vld [vmem:[%s1 + $0x398] sm:$0xf]
  %v344 = vld [vmem:[%s1 + $0x39c] sm:$0xf]
  %v345 = vld [vmem:[%s1 + $0x3a0] sm:$0xf]
  %v346 = vld [vmem:[%s1 + $0x3a4] sm:$0xf]
  %v347 = vld [vmem:[%s1 + $0x3a8] sm:$0xf]
  %v348 = vld [vmem:[%s1 + $0x3ac] sm:$0xf]
  %v349 = vld [vmem:[%s1 + $0x3b0] sm:$0xf]
  %v350 = vld [vmem:[%s1 + $0x3b4] sm:$0xf]
  %v351 = vld [vmem:[%s1 + $0x3b8] sm:$0xf]
  %v352 = vld [vmem:[%s1 + $0x3bc] sm:$0xf]
  %v353 = vld [vmem:[%s1 + $0x3c0] sm:$0xf]
  %v354 = vld [vmem:[%s1 + $0x3c4] sm:$0xf]
  %v355 = vld [vmem:[%s1 + $0x3c8] sm:$0xf]
  %v356 = vld [vmem:[%s1 + $0x3cc] sm:$0xf]
  %v357 = vld [vmem:[%s1 + $0x3d0] sm:$0xf]
  %v358 = vld [vmem:[%s1 + $0x3d4] sm:$0xf]
  %v359 = vld [vmem:[%s1 + $0x3d8] sm:$0xf]
  %v360 = vld [vmem:[%s1 + $0x3dc] sm:$0xf]
  %v361 = vld [vmem:[%s1 + $0x3e0] sm:$0xf]
  %v362 = vld [vmem:[%s1 + $0x3e4] sm:$0xf]
  %v363 = vld [vmem:[%s1 + $0x3e8] sm:$0xf]
  %v364 = vld [vmem:[%s1 + $0x3ec] sm:$0xf]
  %v365 = vld [vmem:[%s1 + $0x3f0] sm:$0xf]
  %v366 = vld [vmem:[%s1 + $0x3f4] sm:$0xf]
  %v367 = vld [vmem:[%s1 + $0x3f8] sm:$0xf]
  %v368 = vld [vmem:[%s1 + $0x3fc] sm:$0xf]
  %v369 = vld [vmem:[%s1 + $0x400] sm:$0xf]
  %v370 = vld [vmem:[%s1 + $0x404] sm:$0xf]
  %v371 = vld [vmem:[%s1 + $0x408] sm:$0xf]
  %v372 = vld [vmem:[%s1 + $0x40c] sm:$0xf]
  %v373 = vld [vmem:[%s1 + $0x410] sm:$0xf]
  %v374 = vld [vmem:[%s1 + $0x414] sm:$0xf]
  %v375 = vld [vmem:[%s1 + $0x418] sm:$0xf]
  %v376 = vld [vmem:[%s1 + $0x41c] sm:$0xf]
  %v377 = vld [vmem:[%s1 + $0x420] sm:$0xf]
  %v378 = vld [vmem:[%s1 + $0x424] sm:$0xf]
  %v379 = vld [vmem:[%s1 + $0x428] sm:$0xf]
  %v380 = vld [vmem:[%s1 + $0x42c] sm:$0xf]
  %v381 = vld [vmem:[%s1 + $0x430] sm:$0xf]
  %v382 = vld [vmem:[%s1 + $0x434] sm:$0xf]
  %v383 = vld [vmem:[%s1 + $0x438] sm:$0xf]
  %v384 = vld [vmem:[%s1 + $0x43c] sm:$0xf]
  %v385 = vld [vmem:[%s1 + $0x440] sm:$0xf]
  %v386 = vld [vmem:[%s1 + $0x444] sm:$0xf]
  %v387 = vld [vmem:[%s1 + $0x448] sm:$0xf]
  %v388 = vld [vmem:[%s1 + $0x44c] sm:$0xf]
  %v389 = vld [vmem:[%s1 + $0x450] sm:$0xf]
  %v390 = vld [vmem:[%s1 + $0x454] sm:$0xf]
  %v391 = vld [vmem:[%s1 + $0x458] sm:$0xf]
  %v392 = vld [vmem:[%s1 + $0x45c] sm:$0xf]
  %v393 = vld [vmem:[%s1 + $0x460] sm:$0xf]
  %v394 = vld [vmem:[%s1 + $0x464] sm:$0xf]
  %v395 = vld [vmem:[%s1 + $0x468] sm:$0xf]
  %v396 = vld [vmem:[%s1 + $0x46c] sm:$0xf]
  %v397 = vld [vmem:[%s1 + $0x470] sm:$0xf]
  %v398 = vld [vmem:[%s1 + $0x474] sm:$0xf]
  %v399 = vld [vmem:[%s1 + $0x478] sm:$0xf]
  %v400 = vld [vmem:[%s1 + $0x47c] sm:$0xf]
  %v401 = vld [vmem:[%s1 + $0x480] sm:$0xf]
  %v402 = vld [vmem:[%s1 + $0x484] sm:$0xf]
  %v403 = vld [vmem:[%s1 + $0x488] sm:$0xf]
  %v404 = vld [vmem:[%s1 + $0x48c] sm:$0xf]
  %v405 = vld [vmem:[%s1 + $0x490] sm:$0xf]
  %v406 = vld [vmem:[%s1 + $0x494] sm:$0xf]
  %v407 = vld [vmem:[%s1 + $0x498] sm:$0xf]
  %v408 = vld [vmem:[%s1 + $0x49c] sm:$0xf]
  %v409 = vld [vmem:[%s1 + $0x4a0] sm:$0xf]
  %v410 = vld [vmem:[%s1 + $0x4a4] sm:$0xf]
  %v411 = vld [vmem:[%s1 + $0x4a8] sm:$0xf]
  %v412 = vld [vmem:[%s1 + $0x4ac] sm:$0xf]
  %v413 = vld [vmem:[%s1 + $0x4b0] sm:$0xf]
  %v414 = vld [vmem:[%s1 + $0x4b4] sm:$0xf]
  %v415 = vld [vmem:[%s1 + $0x4b8] sm:$0xf]
  %v416 = vld [vmem:[%s1 + $0x4bc] sm:$0xf]
  %v417 = vld [vmem:[%s1 + $0x4c0] sm:$0xf]
  %v418 = vld [vmem:[%s1 + $0x4c4] sm:$0xf]
  %v419 = vld [vmem:[%s1 + $0x4c8] sm:$0xf]
  %v420 = vld [vmem:[%s1 + $0x4cc] sm:$0xf]
  %v421 = vld [vmem:[%s1 + $0x4d0] sm:$0xf]
  %v422 = vld [vmem:[%s1 + $0x4d4] sm:$0xf]
  %v423 = vld [vmem:[%s1 + $0x4d8] sm:$0xf]
  %v424 = vld [vmem:[%s1 + $0x4dc] sm:$0xf]
  %v425 = vld [vmem:[%s1 + $0x4e0] sm:$0xf]
  %v426 = vld [vmem:[%s1 + $0x4e4] sm:$0xf]
  %v427 = vld [vmem:[%s1 + $0x4e8] sm:$0xf]
  %v428 = vld [vmem:[%s1 + $0x4ec] sm:$0xf]
  %v429 = vld [vmem:[%s1 + $0x4f0] sm:$0xf]
  %v430 = vld [vmem:[%s1 + $0x4f4] sm:$0xf]
  %v431 = vld [vmem:[%s1 + $0x4f8] sm:$0xf]
  %v432 = vld [vmem:[%s1 + $0x4fc] sm:$0xf]
  %v433 = vld [vmem:[%s1 + $0x500] sm:$0xf]
  %v434 = vld [vmem:[%s1 + $0x504] sm:$0xf]
  %v435 = vld [vmem:[%s1 + $0x508] sm:$0xf]
  %v436 = vld [vmem:[%s1 + $0x50c] sm:$0xf]
  %v437 = vld [vmem:[%s1 + $0x510] sm:$0xf]
  %v438 = vld [vmem:[%s1 + $0x514] sm:$0xf]
  %v439 = vld [vmem:[%s1 + $0x518] sm:$0xf]
  %v440 = vld [vmem:[%s1 + $0x51c] sm:$0xf]
  %v441 = vld [vmem:[%s1 + $0x520] sm:$0xf]
  %v442 = vld [vmem:[%s1 + $0x524] sm:$0xf]
  %v443 = vld [vmem:[%s1 + $0x528] sm:$0xf]
  %v444 = vld [vmem:[%s1 + $0x52c] sm:$0xf]
  %v445 = vld [vmem:[%s1 + $0x530] sm:$0xf]
  %v446 = vld [vmem:[%s1 + $0x534] sm:$0xf]
  %v447 = vld [vmem:[%s1 + $0x538] sm:$0xf]
  %v448 = vld [vmem:[%s1 + $0x53c] sm:$0xf]
  %v449 = vld [vmem:[%s1 + $0x540] sm:$0xf]
  %v450 = vld [vmem:[%s1 + $0x544] sm:$0xf]
  %v451 = vld [vmem:[%s1 + $0x548] sm:$0xf]
  %v452 = vld [vmem:[%s1 + $0x54c] sm:$0xf]
  %v453 = vld [vmem:[%s1 + $0x550] sm:$0xf]
  %v454 = vld [vmem:[%s1 + $0x554] sm:$0xf]
  %v455 = vld [vmem:[%s1 + $0x558] sm:$0xf]
  %v456 = vld [vmem:[%s1 + $0x55c] sm:$0xf]
  %v457 = vld [vmem:[%s1 + $0x560] sm:$0xf]
  %v458 = vld [vmem:[%s1 + $0x564] sm:$0xf]
  %v459 = vld [vmem:[%s1 + $0x568] sm:$0xf]
  %v460 = vld [vmem:[%s1 + $0x56c] sm:$0xf]
  %v461 = vld [vmem:[%s1 + $0x570] sm:$0xf]
  %v462 = vld [vmem:[%s1 + $0x574] sm:$0xf]
  %v463 = vld [vmem:[%s1 + $0x578] sm:$0xf]
  %v464 = vld [vmem:[%s1 + $0x57c] sm:$0xf]
  %v465 = vperm.slane %v14, 0
  %v554 = vunpack.c.l.b16 %v25
  %v555 = vunpack.c.h.b16 %v25
  %v556 = vunpack.c.l.b16 %v26
  %v557 = vunpack.c.h.b16 %v26
  %v558 = vunpack.c.l.b16 %v27
  %v559 = vunpack.c.h.b16 %v27
  %v560 = vunpack.c.l.b16 %v28
  %v561 = vunpack.c.h.b16 %v28
  %v562 = vunpack.c.l.b16 %v29
  %v563 = vunpack.c.h.b16 %v29
  %v564 = vunpack.c.l.b16 %v30
  %v565 = vunpack.c.h.b16 %v30
  %v566 = vunpack.c.l.b16 %v31
  %v567 = vunpack.c.h.b16 %v31
  %v568 = vunpack.c.l.b16 %v32
  %v569 = vunpack.c.h.b16 %v32
  %v570 = vunpack.c.l.b16 %v33
  %v571 = vunpack.c.h.b16 %v33
  %v572 = vunpack.c.l.b16 %v34
  %v573 = vunpack.c.h.b16 %v34
  %v574 = vunpack.c.l.b16 %v35
  %v575 = vunpack.c.h.b16 %v35
  %v576 = vunpack.c.l.b16 %v36
  %v577 = vunpack.c.h.b16 %v36
  %v578 = vunpack.c.l.b16 %v37
  %v579 = vunpack.c.h.b16 %v37
  %v580 = vunpack.c.l.b16 %v38
  %v581 = vunpack.c.h.b16 %v38
  %v582 = vunpack.c.l.b16 %v39
  %v583 = vunpack.c.h.b16 %v39
  %v584 = vunpack.c.l.b16 %v40
  %v585 = vunpack.c.h.b16 %v40
  %v586 = vunpack.c.l.b16 %v41
  %v587 = vunpack.c.h.b16 %v41
  %v588 = vunpack.c.l.b16 %v42
  %v589 = vunpack.c.h.b16 %v42
  %v590 = vunpack.c.l.b16 %v43
  %v591 = vunpack.c.h.b16 %v43
  %v592 = vunpack.c.l.b16 %v44
  %v593 = vunpack.c.h.b16 %v44
  %v594 = vunpack.c.l.b16 %v45
  %v595 = vunpack.c.h.b16 %v45
  %v596 = vunpack.c.l.b16 %v46
  %v597 = vunpack.c.h.b16 %v46
  %v598 = vunpack.c.l.b16 %v47
  %v599 = vunpack.c.h.b16 %v47
  %v600 = vunpack.c.l.b16 %v48
  %v601 = vunpack.c.h.b16 %v48
  %v602 = vunpack.c.l.b16 %v49
  %v603 = vunpack.c.h.b16 %v49
  %v604 = vunpack.c.l.b16 %v50
  %v605 = vunpack.c.h.b16 %v50
  %v606 = vunpack.c.l.b16 %v51
  %v607 = vunpack.c.h.b16 %v51
  %v608 = vunpack.c.l.b16 %v52
  %v609 = vunpack.c.h.b16 %v52
  %v610 = vunpack.c.l.b16 %v53
  %v611 = vunpack.c.h.b16 %v53
  %v612 = vunpack.c.l.b16 %v54
  %v613 = vunpack.c.h.b16 %v54
  %v614 = vunpack.c.l.b16 %v55
  %v615 = vunpack.c.h.b16 %v55
  %v616 = vunpack.c.l.b16 %v56
  %v617 = vunpack.c.h.b16 %v56
  %v618 = vunpack.c.l.b16 %v57
  %v619 = vunpack.c.h.b16 %v57
  %v620 = vunpack.c.l.b16 %v58
  %v621 = vunpack.c.h.b16 %v58
  %v622 = vunpack.c.l.b16 %v59
  %v623 = vunpack.c.h.b16 %v59
  %v624 = vunpack.c.l.b16 %v60
  %v625 = vunpack.c.h.b16 %v60
  %v626 = vunpack.c.l.b16 %v61
  %v627 = vunpack.c.h.b16 %v61
  %v628 = vunpack.c.l.b16 %v62
  %v629 = vunpack.c.h.b16 %v62
  %v630 = vunpack.c.l.b16 %v63
  %v631 = vunpack.c.h.b16 %v63
  %v632 = vunpack.c.l.b16 %v64
  %v633 = vunpack.c.h.b16 %v64
  %v634 = vunpack.c.l.b16 %v65
  %v635 = vunpack.c.h.b16 %v65
  %v636 = vunpack.c.l.b16 %v66
  %v637 = vunpack.c.h.b16 %v66
  %v638 = vunpack.c.l.b16 %v67
  %v639 = vunpack.c.h.b16 %v67
  %v640 = vunpack.c.l.b16 %v68
  %v641 = vunpack.c.h.b16 %v68
  %v642 = vunpack.c.l.b16 %v69
  %v643 = vunpack.c.h.b16 %v69
  %v644 = vunpack.c.l.b16 %v70
  %v645 = vunpack.c.h.b16 %v70
  %v646 = vunpack.c.l.b16 %v71
  %v647 = vunpack.c.h.b16 %v71
  %v648 = vunpack.c.l.b16 %v72
  %v649 = vunpack.c.h.b16 %v72
  %v650 = vunpack.c.l.b16 %v73
  %v651 = vunpack.c.h.b16 %v73
  %v652 = vunpack.c.l.b16 %v74
  %v653 = vunpack.c.h.b16 %v74
  %v654 = vunpack.c.l.b16 %v75
  %v655 = vunpack.c.h.b16 %v75
  %v656 = vunpack.c.l.b16 %v76
  %v657 = vunpack.c.h.b16 %v76
  %v658 = vunpack.c.l.b16 %v77
  %v659 = vunpack.c.h.b16 %v77
  %v660 = vunpack.c.l.b16 %v78
  %v661 = vunpack.c.h.b16 %v78
  %v662 = vunpack.c.l.b16 %v79
  %v663 = vunpack.c.h.b16 %v79
  %v664 = vunpack.c.l.b16 %v80
  %v665 = vunpack.c.h.b16 %v80
  %v666 = vunpack.c.l.b16 %v81
  %v667 = vunpack.c.h.b16 %v81
  %v668 = vunpack.c.l.b16 %v82
  %v669 = vunpack.c.h.b16 %v82
  %v670 = vunpack.c.l.b16 %v83
  %v671 = vunpack.c.h.b16 %v83
  %v672 = vunpack.c.l.b16 %v84
  %v673 = vunpack.c.h.b16 %v84
  %v674 = vunpack.c.l.b16 %v85
  %v675 = vunpack.c.h.b16 %v85
  %v676 = vunpack.c.l.b16 %v86
  %v677 = vunpack.c.h.b16 %v86
  %v678 = vunpack.c.l.b16 %v87
  %v679 = vunpack.c.h.b16 %v87
  %v680 = vunpack.c.l.b16 %v88
  %v681 = vunpack.c.h.b16 %v88
  %v682 = vunpack.c.l.b16 %v89
  %v683 = vunpack.c.h.b16 %v89
  %v684 = vunpack.c.l.b16 %v90
  %v685 = vunpack.c.h.b16 %v90
  %v686 = vunpack.c.l.b16 %v91
  %v687 = vunpack.c.h.b16 %v91
  %v688 = vunpack.c.l.b16 %v92
  %v689 = vunpack.c.h.b16 %v92
  %v690 = vunpack.c.l.b16 %v93
  %v691 = vunpack.c.h.b16 %v93
  %v692 = vunpack.c.l.b16 %v94
  %v693 = vunpack.c.h.b16 %v94
  %v694 = vunpack.c.l.b16 %v95
  %v695 = vunpack.c.h.b16 %v95
  %v696 = vunpack.c.l.b16 %v96
  %v697 = vunpack.c.h.b16 %v96
  %v698 = vunpack.c.l.b16 %v97
  %v699 = vunpack.c.h.b16 %v97
  %v700 = vunpack.c.l.b16 %v98
  %v701 = vunpack.c.h.b16 %v98
  %v702 = vunpack.c.l.b16 %v99
  %v703 = vunpack.c.h.b16 %v99
  %v704 = vunpack.c.l.b16 %v100
  %v705 = vunpack.c.h.b16 %v100
  %v706 = vunpack.c.l.b16 %v101
  %v707 = vunpack.c.h.b16 %v101
  %v708 = vunpack.c.l.b16 %v102
  %v709 = vunpack.c.h.b16 %v102
  %v710 = vunpack.c.l.b16 %v103
  %v711 = vunpack.c.h.b16 %v103
  %v712 = vunpack.c.l.b16 %v104
  %v713 = vunpack.c.h.b16 %v104
  %v714 = vunpack.c.l.b16 %v105
  %v715 = vunpack.c.h.b16 %v105
  %v716 = vunpack.c.l.b16 %v106
  %v717 = vunpack.c.h.b16 %v106
  %v718 = vunpack.c.l.b16 %v107
  %v719 = vunpack.c.h.b16 %v107
  %v720 = vunpack.c.l.b16 %v108
  %v721 = vunpack.c.h.b16 %v108
  %v722 = vunpack.c.l.b16 %v109
  %v723 = vunpack.c.h.b16 %v109
  %v724 = vunpack.c.l.b16 %v110
  %v725 = vunpack.c.h.b16 %v110
  %v726 = vunpack.c.l.b16 %v111
  %v727 = vunpack.c.h.b16 %v111
  %v728 = vunpack.c.l.b16 %v112
  %v729 = vunpack.c.h.b16 %v112
  %v730 = vpack.c.b16 %v576, %v554
  %v731 = vpack.c.b16 %v577, %v555
  %v732 = vpack.c.b16 %v578, %v556
  %v733 = vpack.c.b16 %v579, %v557
  %v734 = vpack.c.b16 %v580, %v558
  %v735 = vpack.c.b16 %v581, %v559
  %v736 = vpack.c.b16 %v582, %v560
  %v737 = vpack.c.b16 %v583, %v561
  %v738 = vpack.c.b16 %v584, %v562
  %v739 = vpack.c.b16 %v585, %v563
  %v740 = vpack.c.b16 %v586, %v564
  %v741 = vpack.c.b16 %v587, %v565
  %v742 = vpack.c.b16 %v588, %v566
  %v743 = vpack.c.b16 %v589, %v567
  %v744 = vpack.c.b16 %v590, %v568
  %v745 = vpack.c.b16 %v591, %v569
  %v746 = vpack.c.b16 %v592, %v570
  %v747 = vpack.c.b16 %v593, %v571
  %v748 = vpack.c.b16 %v594, %v572
  %v749 = vpack.c.b16 %v595, %v573
  %v750 = vpack.c.b16 %v596, %v574
  %v751 = vpack.c.b16 %v597, %v575
  %v752 = vpack.c.b16 %v620, %v598
  %v753 = vpack.c.b16 %v621, %v599
  %v754 = vpack.c.b16 %v622, %v600
  %v755 = vpack.c.b16 %v623, %v601
  %v756 = vpack.c.b16 %v624, %v602
  %v757 = vpack.c.b16 %v625, %v603
  %v758 = vpack.c.b16 %v626, %v604
  %v759 = vpack.c.b16 %v627, %v605
  %v760 = vpack.c.b16 %v628, %v606
  %v761 = vpack.c.b16 %v629, %v607
  %v762 = vpack.c.b16 %v630, %v608
  %v763 = vpack.c.b16 %v631, %v609
  %v764 = vpack.c.b16 %v632, %v610
  %v765 = vpack.c.b16 %v633, %v611
  %v766 = vpack.c.b16 %v634, %v612
  %v767 = vpack.c.b16 %v635, %v613
  %v768 = vpack.c.b16 %v636, %v614
  %v769 = vpack.c.b16 %v637, %v615
  %v770 = vpack.c.b16 %v638, %v616
  %v771 = vpack.c.b16 %v639, %v617
  %v772 = vpack.c.b16 %v640, %v618
  %v773 = vpack.c.b16 %v641, %v619
  %v774 = vpack.c.b16 %v664, %v642
  %v775 = vpack.c.b16 %v665, %v643
  %v776 = vpack.c.b16 %v666, %v644
  %v777 = vpack.c.b16 %v667, %v645
  %v778 = vpack.c.b16 %v668, %v646
  %v779 = vpack.c.b16 %v669, %v647
  %v780 = vpack.c.b16 %v670, %v648
  %v781 = vpack.c.b16 %v671, %v649
  %v782 = vpack.c.b16 %v672, %v650
  %v783 = vpack.c.b16 %v673, %v651
  %v784 = vpack.c.b16 %v674, %v652
  %v785 = vpack.c.b16 %v675, %v653
  %v786 = vpack.c.b16 %v676, %v654
  %v787 = vpack.c.b16 %v677, %v655
  %v788 = vpack.c.b16 %v678, %v656
  %v789 = vpack.c.b16 %v679, %v657
  %v790 = vpack.c.b16 %v680, %v658
  %v791 = vpack.c.b16 %v681, %v659
  %v792 = vpack.c.b16 %v682, %v660
  %v793 = vpack.c.b16 %v683, %v661
  %v794 = vpack.c.b16 %v684, %v662
  %v795 = vpack.c.b16 %v685, %v663
  %v796 = vpack.c.b16 %v708, %v686
  %v797 = vpack.c.b16 %v709, %v687
  %v798 = vpack.c.b16 %v710, %v688
  %v799 = vpack.c.b16 %v711, %v689
  %v800 = vpack.c.b16 %v712, %v690
  %v801 = vpack.c.b16 %v713, %v691
  %v802 = vpack.c.b16 %v714, %v692
  %v803 = vpack.c.b16 %v715, %v693
  %v804 = vpack.c.b16 %v716, %v694
  %v805 = vpack.c.b16 %v717, %v695
  %v806 = vpack.c.b16 %v718, %v696
  %v807 = vpack.c.b16 %v719, %v697
  %v808 = vpack.c.b16 %v720, %v698
  %v809 = vpack.c.b16 %v721, %v699
  %v810 = vpack.c.b16 %v722, %v700
  %v811 = vpack.c.b16 %v723, %v701
  %v812 = vpack.c.b16 %v724, %v702
  %v813 = vpack.c.b16 %v725, %v703
  %v814 = vpack.c.b16 %v726, %v704
  %v815 = vpack.c.b16 %v727, %v705
  %v816 = vpack.c.b16 %v728, %v706
  %v817 = vpack.c.b16 %v729, %v707
  %v1258 = vunpack.c.l.b16 %v113
  %v1259 = vunpack.c.l.b16 %v114
  %v1260 = vunpack.c.l.b16 %v115
  %v1261 = vunpack.c.l.b16 %v116
  %v1262 = vunpack.c.l.b16 %v117
  %v1263 = vunpack.c.l.b16 %v118
  %v1264 = vunpack.c.l.b16 %v119
  %v1265 = vunpack.c.l.b16 %v120
  %v1266 = vunpack.c.l.b16 %v121
  %v1267 = vunpack.c.l.b16 %v122
  %v1268 = vunpack.c.l.b16 %v123
  %v1269 = vunpack.c.l.b16 %v124
  %v1270 = vunpack.c.l.b16 %v125
  %v1271 = vunpack.c.l.b16 %v126
  %v1272 = vunpack.c.l.b16 %v127
  %v1273 = vunpack.c.l.b16 %v128
  %v1274 = vunpack.c.l.b16 %v129
  %v1275 = vunpack.c.l.b16 %v130
  %v1276 = vunpack.c.l.b16 %v131
  %v1277 = vunpack.c.l.b16 %v132
  %v1278 = vunpack.c.l.b16 %v133
  %v1279 = vunpack.c.l.b16 %v134
  %v1280 = vunpack.c.l.b16 %v135
  %v1281 = vunpack.c.l.b16 %v136
  %v1282 = vunpack.c.l.b16 %v137
  %v1283 = vunpack.c.l.b16 %v138
  %v1284 = vunpack.c.l.b16 %v139
  %v1285 = vunpack.c.l.b16 %v140
  %v1286 = vunpack.c.l.b16 %v141
  %v1287 = vunpack.c.l.b16 %v142
  %v1288 = vunpack.c.l.b16 %v143
  %v1289 = vunpack.c.l.b16 %v144
  %v1290 = vunpack.c.l.b16 %v145
  %v1291 = vunpack.c.l.b16 %v146
  %v1292 = vunpack.c.l.b16 %v147
  %v1293 = vunpack.c.l.b16 %v148
  %v1294 = vunpack.c.l.b16 %v149
  %v1295 = vunpack.c.l.b16 %v150
  %v1296 = vunpack.c.l.b16 %v151
  %v1297 = vunpack.c.l.b16 %v152
  %v1298 = vunpack.c.l.b16 %v153
  %v1299 = vunpack.c.l.b16 %v154
  %v1300 = vunpack.c.l.b16 %v155
  %v1301 = vunpack.c.l.b16 %v156
  %v1302 = vunpack.c.l.b16 %v157
  %v1303 = vunpack.c.l.b16 %v158
  %v1304 = vunpack.c.l.b16 %v159
  %v1305 = vunpack.c.l.b16 %v160
  %v1306 = vunpack.c.l.b16 %v161
  %v1307 = vunpack.c.l.b16 %v162
  %v1308 = vunpack.c.l.b16 %v163
  %v1309 = vunpack.c.l.b16 %v164
  %v1310 = vunpack.c.l.b16 %v165
  %v1311 = vunpack.c.l.b16 %v166
  %v1312 = vunpack.c.l.b16 %v167
  %v1313 = vunpack.c.l.b16 %v168
  %v1314 = vunpack.c.l.b16 %v169
  %v1315 = vunpack.c.l.b16 %v170
  %v1316 = vunpack.c.l.b16 %v171
  %v1317 = vunpack.c.l.b16 %v172
  %v1318 = vunpack.c.l.b16 %v173
  %v1319 = vunpack.c.l.b16 %v174
  %v1320 = vunpack.c.l.b16 %v175
  %v1321 = vunpack.c.l.b16 %v176
  %v1322 = vunpack.c.l.b16 %v177
  %v1323 = vunpack.c.l.b16 %v178
  %v1324 = vunpack.c.l.b16 %v179
  %v1325 = vunpack.c.l.b16 %v180
  %v1326 = vunpack.c.l.b16 %v181
  %v1327 = vunpack.c.l.b16 %v182
  %v1328 = vunpack.c.l.b16 %v183
  %v1329 = vunpack.c.l.b16 %v184
  %v1330 = vunpack.c.l.b16 %v185
  %v1331 = vunpack.c.l.b16 %v186
  %v1332 = vunpack.c.l.b16 %v187
  %v1333 = vunpack.c.l.b16 %v188
  %v1334 = vunpack.c.l.b16 %v189
  %v1335 = vunpack.c.l.b16 %v190
  %v1336 = vunpack.c.l.b16 %v191
  %v1337 = vunpack.c.l.b16 %v192
  %v1338 = vunpack.c.l.b16 %v193
  %v1339 = vunpack.c.l.b16 %v194
  %v1340 = vunpack.c.l.b16 %v195
  %v1341 = vunpack.c.l.b16 %v196
  %v1342 = vunpack.c.l.b16 %v197
  %v1343 = vunpack.c.l.b16 %v198
  %v1344 = vunpack.c.l.b16 %v199
  %v1345 = vunpack.c.l.b16 %v200
  %v1346 = vunpack.c.l.b16 %v201
  %v1347 = vunpack.c.l.b16 %v202
  %v1348 = vunpack.c.l.b16 %v203
  %v1349 = vunpack.c.l.b16 %v204
  %v1350 = vunpack.c.l.b16 %v205
  %v1351 = vunpack.c.l.b16 %v206
  %v1352 = vunpack.c.l.b16 %v207
  %v1353 = vunpack.c.l.b16 %v208
  %v1354 = vunpack.c.l.b16 %v209
  %v1355 = vunpack.c.l.b16 %v210
  %v1356 = vunpack.c.l.b16 %v211
  %v1357 = vunpack.c.l.b16 %v212
  %v1358 = vunpack.c.l.b16 %v213
  %v1359 = vunpack.c.l.b16 %v214
  %v1360 = vunpack.c.l.b16 %v215
  %v1361 = vunpack.c.l.b16 %v216
  %v1362 = vunpack.c.l.b16 %v217
  %v1363 = vunpack.c.l.b16 %v218
  %v1364 = vunpack.c.l.b16 %v219
  %v1365 = vunpack.c.l.b16 %v220
  %v1366 = vunpack.c.l.b16 %v221
  %v1367 = vunpack.c.l.b16 %v222
  %v1368 = vunpack.c.l.b16 %v223
  %v1369 = vunpack.c.l.b16 %v224
  %v1370 = vunpack.c.l.b16 %v225
  %v1371 = vunpack.c.l.b16 %v226
  %v1372 = vunpack.c.l.b16 %v227
  %v1373 = vunpack.c.l.b16 %v228
  %v1374 = vunpack.c.l.b16 %v229
  %v1375 = vunpack.c.l.b16 %v230
  %v1376 = vunpack.c.l.b16 %v231
  %v1377 = vunpack.c.l.b16 %v232
  %v1378 = vunpack.c.l.b16 %v233
  %v1379 = vunpack.c.l.b16 %v234
  %v1380 = vunpack.c.l.b16 %v235
  %v1381 = vunpack.c.l.b16 %v236
  %v1382 = vunpack.c.l.b16 %v237
  %v1383 = vunpack.c.l.b16 %v238
  %v1384 = vunpack.c.l.b16 %v239
  %v1385 = vunpack.c.l.b16 %v240
  %v1386 = vunpack.c.l.b16 %v241
  %v1387 = vunpack.c.l.b16 %v242
  %v1388 = vunpack.c.l.b16 %v243
  %v1389 = vunpack.c.l.b16 %v244
  %v1390 = vunpack.c.l.b16 %v245
  %v1391 = vunpack.c.l.b16 %v246
  %v1392 = vunpack.c.l.b16 %v247
  %v1393 = vunpack.c.l.b16 %v248
  %v1394 = vunpack.c.l.b16 %v249
  %v1395 = vunpack.c.l.b16 %v250
  %v1396 = vunpack.c.l.b16 %v251
  %v1397 = vunpack.c.l.b16 %v252
  %v1398 = vunpack.c.l.b16 %v253
  %v1399 = vunpack.c.l.b16 %v254
  %v1400 = vunpack.c.l.b16 %v255
  %v1401 = vunpack.c.l.b16 %v256
  %v1402 = vunpack.c.l.b16 %v257
  %v1403 = vunpack.c.l.b16 %v258
  %v1404 = vunpack.c.l.b16 %v259
  %v1405 = vunpack.c.l.b16 %v260
  %v1406 = vunpack.c.l.b16 %v261
  %v1407 = vunpack.c.l.b16 %v262
  %v1408 = vunpack.c.l.b16 %v263
  %v1409 = vunpack.c.l.b16 %v264
  %v1410 = vunpack.c.l.b16 %v265
  %v1411 = vunpack.c.l.b16 %v266
  %v1412 = vunpack.c.l.b16 %v267
  %v1413 = vunpack.c.l.b16 %v268
  %v1414 = vunpack.c.l.b16 %v269
  %v1415 = vunpack.c.l.b16 %v270
  %v1416 = vunpack.c.l.b16 %v271
  %v1417 = vunpack.c.l.b16 %v272
  %v1418 = vunpack.c.l.b16 %v273
  %v1419 = vunpack.c.l.b16 %v274
  %v1420 = vunpack.c.l.b16 %v275
  %v1421 = vunpack.c.l.b16 %v276
  %v1422 = vunpack.c.l.b16 %v277
  %v1423 = vunpack.c.l.b16 %v278
  %v1424 = vunpack.c.l.b16 %v279
  %v1425 = vunpack.c.l.b16 %v280
  %v1426 = vunpack.c.l.b16 %v281
  %v1427 = vunpack.c.l.b16 %v282
  %v1428 = vunpack.c.l.b16 %v283
  %v1429 = vunpack.c.l.b16 %v284
  %v1430 = vunpack.c.l.b16 %v285
  %v1431 = vunpack.c.l.b16 %v286
  %v1432 = vunpack.c.l.b16 %v287
  %v1433 = vunpack.c.l.b16 %v288
  %v1434 = vunpack.c.l.b16 %v289
  %v1435 = vunpack.c.l.b16 %v290
  %v1436 = vunpack.c.l.b16 %v291
  %v1437 = vunpack.c.l.b16 %v292
  %v1438 = vunpack.c.l.b16 %v293
  %v1439 = vunpack.c.l.b16 %v294
  %v1440 = vunpack.c.l.b16 %v295
  %v1441 = vunpack.c.l.b16 %v296
  %v1442 = vunpack.c.l.b16 %v297
  %v1443 = vunpack.c.l.b16 %v298
  %v1444 = vunpack.c.l.b16 %v299
  %v1445 = vunpack.c.l.b16 %v300
  %v1446 = vunpack.c.l.b16 %v301
  %v1447 = vunpack.c.l.b16 %v302
  %v1448 = vunpack.c.l.b16 %v303
  %v1449 = vunpack.c.l.b16 %v304
  %v1450 = vunpack.c.l.b16 %v305
  %v1451 = vunpack.c.l.b16 %v306
  %v1452 = vunpack.c.l.b16 %v307
  %v1453 = vunpack.c.l.b16 %v308
  %v1454 = vunpack.c.l.b16 %v309
  %v1455 = vunpack.c.l.b16 %v310
  %v1456 = vunpack.c.l.b16 %v311
  %v1457 = vunpack.c.l.b16 %v312
  %v1458 = vunpack.c.l.b16 %v313
  %v1459 = vunpack.c.l.b16 %v314
  %v1460 = vunpack.c.l.b16 %v315
  %v1461 = vunpack.c.l.b16 %v316
  %v1462 = vunpack.c.l.b16 %v317
  %v1463 = vunpack.c.l.b16 %v318
  %v1464 = vunpack.c.l.b16 %v319
  %v1465 = vunpack.c.l.b16 %v320
  %v1466 = vunpack.c.l.b16 %v321
  %v1467 = vunpack.c.l.b16 %v322
  %v1468 = vunpack.c.l.b16 %v323
  %v1469 = vunpack.c.l.b16 %v324
  %v1470 = vunpack.c.l.b16 %v325
  %v1471 = vunpack.c.l.b16 %v326
  %v1472 = vunpack.c.l.b16 %v327
  %v1473 = vunpack.c.l.b16 %v328
  %v1474 = vunpack.c.l.b16 %v329
  %v1475 = vunpack.c.l.b16 %v330
  %v1476 = vunpack.c.l.b16 %v331
  %v1477 = vunpack.c.l.b16 %v332
  %v1478 = vunpack.c.l.b16 %v333
  %v1479 = vunpack.c.l.b16 %v334
  %v1480 = vunpack.c.l.b16 %v335
  %v1481 = vunpack.c.l.b16 %v336
  %v1482 = vunpack.c.l.b16 %v337
  %v1483 = vunpack.c.l.b16 %v338
  %v1484 = vunpack.c.l.b16 %v339
  %v1485 = vunpack.c.l.b16 %v340
  %v1486 = vunpack.c.l.b16 %v341
  %v1487 = vunpack.c.l.b16 %v342
  %v1488 = vunpack.c.l.b16 %v343
  %v1489 = vunpack.c.l.b16 %v344
  %v1490 = vunpack.c.l.b16 %v345
  %v1491 = vunpack.c.l.b16 %v346
  %v1492 = vunpack.c.l.b16 %v347
  %v1493 = vunpack.c.l.b16 %v348
  %v1494 = vunpack.c.l.b16 %v349
  %v1495 = vunpack.c.l.b16 %v350
  %v1496 = vunpack.c.l.b16 %v351
  %v1497 = vunpack.c.l.b16 %v352
  %v1498 = vunpack.c.l.b16 %v353
  %v1499 = vunpack.c.l.b16 %v354
  %v1500 = vunpack.c.l.b16 %v355
  %v1501 = vunpack.c.l.b16 %v356
  %v1502 = vunpack.c.l.b16 %v357
  %v1503 = vunpack.c.l.b16 %v358
  %v1504 = vunpack.c.l.b16 %v359
  %v1505 = vunpack.c.l.b16 %v360
  %v1506 = vunpack.c.l.b16 %v361
  %v1507 = vunpack.c.l.b16 %v362
  %v1508 = vunpack.c.l.b16 %v363
  %v1509 = vunpack.c.l.b16 %v364
  %v1510 = vunpack.c.l.b16 %v365
  %v1511 = vunpack.c.l.b16 %v366
  %v1512 = vunpack.c.l.b16 %v367
  %v1513 = vunpack.c.l.b16 %v368
  %v1514 = vunpack.c.l.b16 %v369
  %v1515 = vunpack.c.l.b16 %v370
  %v1516 = vunpack.c.l.b16 %v371
  %v1517 = vunpack.c.l.b16 %v372
  %v1518 = vunpack.c.l.b16 %v373
  %v1519 = vunpack.c.l.b16 %v374
  %v1520 = vunpack.c.l.b16 %v375
  %v1521 = vunpack.c.l.b16 %v376
  %v1522 = vunpack.c.l.b16 %v377
  %v1523 = vunpack.c.l.b16 %v378
  %v1524 = vunpack.c.l.b16 %v379
  %v1525 = vunpack.c.l.b16 %v380
  %v1526 = vunpack.c.l.b16 %v381
  %v1527 = vunpack.c.l.b16 %v382
  %v1528 = vunpack.c.l.b16 %v383
  %v1529 = vunpack.c.l.b16 %v384
  %v1530 = vunpack.c.l.b16 %v385
  %v1531 = vunpack.c.l.b16 %v386
  %v1532 = vunpack.c.l.b16 %v387
  %v1533 = vunpack.c.l.b16 %v388
  %v1534 = vunpack.c.l.b16 %v389
  %v1535 = vunpack.c.l.b16 %v390
  %v1536 = vunpack.c.l.b16 %v391
  %v1537 = vunpack.c.l.b16 %v392
  %v1538 = vunpack.c.l.b16 %v393
  %v1539 = vunpack.c.l.b16 %v394
  %v1540 = vunpack.c.l.b16 %v395
  %v1541 = vunpack.c.l.b16 %v396
  %v1542 = vunpack.c.l.b16 %v397
  %v1543 = vunpack.c.l.b16 %v398
  %v1544 = vunpack.c.l.b16 %v399
  %v1545 = vunpack.c.l.b16 %v400
  %v1546 = vunpack.c.l.b16 %v401
  %v1547 = vunpack.c.l.b16 %v402
  %v1548 = vunpack.c.l.b16 %v403
  %v1549 = vunpack.c.l.b16 %v404
  %v1550 = vunpack.c.l.b16 %v405
  %v1551 = vunpack.c.l.b16 %v406
  %v1552 = vunpack.c.l.b16 %v407
  %v1553 = vunpack.c.l.b16 %v408
  %v1554 = vunpack.c.l.b16 %v409
  %v1555 = vunpack.c.l.b16 %v410
  %v1556 = vunpack.c.l.b16 %v411
  %v1557 = vunpack.c.l.b16 %v412
  %v1558 = vunpack.c.l.b16 %v413
  %v1559 = vunpack.c.l.b16 %v414
  %v1560 = vunpack.c.l.b16 %v415
  %v1561 = vunpack.c.l.b16 %v416
  %v1562 = vunpack.c.l.b16 %v417
  %v1563 = vunpack.c.l.b16 %v418
  %v1564 = vunpack.c.l.b16 %v419
  %v1565 = vunpack.c.l.b16 %v420
  %v1566 = vunpack.c.l.b16 %v421
  %v1567 = vunpack.c.l.b16 %v422
  %v1568 = vunpack.c.l.b16 %v423
  %v1569 = vunpack.c.l.b16 %v424
  %v1570 = vunpack.c.l.b16 %v425
  %v1571 = vunpack.c.l.b16 %v426
  %v1572 = vunpack.c.l.b16 %v427
  %v1573 = vunpack.c.l.b16 %v428
  %v1574 = vunpack.c.l.b16 %v429
  %v1575 = vunpack.c.l.b16 %v430
  %v1576 = vunpack.c.l.b16 %v431
  %v1577 = vunpack.c.l.b16 %v432
  %v1578 = vunpack.c.l.b16 %v433
  %v1579 = vunpack.c.l.b16 %v434
  %v1580 = vunpack.c.l.b16 %v435
  %v1581 = vunpack.c.l.b16 %v436
  %v1582 = vunpack.c.l.b16 %v437
  %v1583 = vunpack.c.l.b16 %v438
  %v1584 = vunpack.c.l.b16 %v439
  %v1585 = vunpack.c.l.b16 %v440
  %v1586 = vunpack.c.l.b16 %v441
  %v1587 = vunpack.c.l.b16 %v442
  %v1588 = vunpack.c.l.b16 %v443
  %v1589 = vunpack.c.l.b16 %v444
  %v1590 = vunpack.c.l.b16 %v445
  %v1591 = vunpack.c.l.b16 %v446
  %v1592 = vunpack.c.l.b16 %v447
  %v1593 = vunpack.c.l.b16 %v448
  %v1594 = vunpack.c.l.b16 %v449
  %v1595 = vunpack.c.l.b16 %v450
  %v1596 = vunpack.c.l.b16 %v451
  %v1597 = vunpack.c.l.b16 %v452
  %v1598 = vunpack.c.l.b16 %v453
  %v1599 = vunpack.c.l.b16 %v454
  %v1600 = vunpack.c.l.b16 %v455
  %v1601 = vunpack.c.l.b16 %v456
  %v1602 = vunpack.c.l.b16 %v457
  %v1603 = vunpack.c.l.b16 %v458
  %v1604 = vunpack.c.l.b16 %v459
  %v1605 = vunpack.c.l.b16 %v460
  %v1606 = vunpack.c.l.b16 %v461
  %v1607 = vunpack.c.l.b16 %v462
  %v1608 = vunpack.c.l.b16 %v463
  %v1609 = vunpack.c.l.b16 %v464
  %v1610 = vpack.c.b16 %v1259, %v1258
  %v1611 = vpack.c.b16 %v1261, %v1260
  %v1612 = vpack.c.b16 %v1263, %v1262
  %v1613 = vpack.c.b16 %v1265, %v1264
  %v1614 = vpack.c.b16 %v1267, %v1266
  %v1615 = vpack.c.b16 %v1269, %v1268
  %v1616 = vpack.c.b16 %v1271, %v1270
  %v1617 = vpack.c.b16 %v1273, %v1272
  %v1618 = vpack.c.b16 %v1275, %v1274
  %v1619 = vpack.c.b16 %v1277, %v1276
  %v1620 = vpack.c.b16 %v1279, %v1278
  %v1621 = vpack.c.b16 %v1281, %v1280
  %v1622 = vpack.c.b16 %v1283, %v1282
  %v1623 = vpack.c.b16 %v1285, %v1284
  %v1624 = vpack.c.b16 %v1287, %v1286
  %v1625 = vpack.c.b16 %v1289, %v1288
  %v1626 = vpack.c.b16 %v1291, %v1290
  %v1627 = vpack.c.b16 %v1293, %v1292
  %v1628 = vpack.c.b16 %v1295, %v1294
  %v1629 = vpack.c.b16 %v1297, %v1296
  %v1630 = vpack.c.b16 %v1299, %v1298
  %v1631 = vpack.c.b16 %v1301, %v1300
  %v1632 = vpack.c.b16 %v1303, %v1302
  %v1633 = vpack.c.b16 %v1305, %v1304
  %v1634 = vpack.c.b16 %v1307, %v1306
  %v1635 = vpack.c.b16 %v1309, %v1308
  %v1636 = vpack.c.b16 %v1311, %v1310
  %v1637 = vpack.c.b16 %v1313, %v1312
  %v1638 = vpack.c.b16 %v1315, %v1314
  %v1639 = vpack.c.b16 %v1317, %v1316
  %v1640 = vpack.c.b16 %v1319, %v1318
  %v1641 = vpack.c.b16 %v1321, %v1320
  %v1642 = vpack.c.b16 %v1323, %v1322
  %v1643 = vpack.c.b16 %v1325, %v1324
  %v1644 = vpack.c.b16 %v1327, %v1326
  %v1645 = vpack.c.b16 %v1329, %v1328
  %v1646 = vpack.c.b16 %v1331, %v1330
  %v1647 = vpack.c.b16 %v1333, %v1332
  %v1648 = vpack.c.b16 %v1335, %v1334
  %v1649 = vpack.c.b16 %v1337, %v1336
  %v1650 = vpack.c.b16 %v1339, %v1338
  %v1651 = vpack.c.b16 %v1341, %v1340
  %v1652 = vpack.c.b16 %v1343, %v1342
  %v1653 = vpack.c.b16 %v1345, %v1344
  %v1654 = vpack.c.b16 %v1347, %v1346
  %v1655 = vpack.c.b16 %v1349, %v1348
  %v1656 = vpack.c.b16 %v1351, %v1350
  %v1657 = vpack.c.b16 %v1353, %v1352
  %v1658 = vpack.c.b16 %v1355, %v1354
  %v1659 = vpack.c.b16 %v1357, %v1356
  %v1660 = vpack.c.b16 %v1359, %v1358
  %v1661 = vpack.c.b16 %v1361, %v1360
  %v1662 = vpack.c.b16 %v1363, %v1362
  %v1663 = vpack.c.b16 %v1365, %v1364
  %v1664 = vpack.c.b16 %v1367, %v1366
  %v1665 = vpack.c.b16 %v1369, %v1368
  %v1666 = vpack.c.b16 %v1371, %v1370
  %v1667 = vpack.c.b16 %v1373, %v1372
  %v1668 = vpack.c.b16 %v1375, %v1374
  %v1669 = vpack.c.b16 %v1377, %v1376
  %v1670 = vpack.c.b16 %v1379, %v1378
  %v1671 = vpack.c.b16 %v1381, %v1380
  %v1672 = vpack.c.b16 %v1383, %v1382
  %v1673 = vpack.c.b16 %v1385, %v1384
  %v1674 = vpack.c.b16 %v1387, %v1386
  %v1675 = vpack.c.b16 %v1389, %v1388
  %v1676 = vpack.c.b16 %v1391, %v1390
  %v1677 = vpack.c.b16 %v1393, %v1392
  %v1678 = vpack.c.b16 %v1395, %v1394
  %v1679 = vpack.c.b16 %v1397, %v1396
  %v1680 = vpack.c.b16 %v1399, %v1398
  %v1681 = vpack.c.b16 %v1401, %v1400
  %v1682 = vpack.c.b16 %v1403, %v1402
  %v1683 = vpack.c.b16 %v1405, %v1404
  %v1684 = vpack.c.b16 %v1407, %v1406
  %v1685 = vpack.c.b16 %v1409, %v1408
  %v1686 = vpack.c.b16 %v1411, %v1410
  %v1687 = vpack.c.b16 %v1413, %v1412
  %v1688 = vpack.c.b16 %v1415, %v1414
  %v1689 = vpack.c.b16 %v1417, %v1416
  %v1690 = vpack.c.b16 %v1419, %v1418
  %v1691 = vpack.c.b16 %v1421, %v1420
  %v1692 = vpack.c.b16 %v1423, %v1422
  %v1693 = vpack.c.b16 %v1425, %v1424
  %v1694 = vpack.c.b16 %v1427, %v1426
  %v1695 = vpack.c.b16 %v1429, %v1428
  %v1696 = vpack.c.b16 %v1431, %v1430
  %v1697 = vpack.c.b16 %v1433, %v1432
  %v1698 = vpack.c.b16 %v1435, %v1434
  %v1699 = vpack.c.b16 %v1437, %v1436
  %v1700 = vpack.c.b16 %v1439, %v1438
  %v1701 = vpack.c.b16 %v1441, %v1440
  %v1702 = vpack.c.b16 %v1443, %v1442
  %v1703 = vpack.c.b16 %v1445, %v1444
  %v1704 = vpack.c.b16 %v1447, %v1446
  %v1705 = vpack.c.b16 %v1449, %v1448
  %v1706 = vpack.c.b16 %v1451, %v1450
  %v1707 = vpack.c.b16 %v1453, %v1452
  %v1708 = vpack.c.b16 %v1455, %v1454
  %v1709 = vpack.c.b16 %v1457, %v1456
  %v1710 = vpack.c.b16 %v1459, %v1458
  %v1711 = vpack.c.b16 %v1461, %v1460
  %v1712 = vpack.c.b16 %v1463, %v1462
  %v1713 = vpack.c.b16 %v1465, %v1464
  %v1714 = vpack.c.b16 %v1467, %v1466
  %v1715 = vpack.c.b16 %v1469, %v1468
  %v1716 = vpack.c.b16 %v1471, %v1470
  %v1717 = vpack.c.b16 %v1473, %v1472
  %v1718 = vpack.c.b16 %v1475, %v1474
  %v1719 = vpack.c.b16 %v1477, %v1476
  %v1720 = vpack.c.b16 %v1479, %v1478
  %v1721 = vpack.c.b16 %v1481, %v1480
  %v1722 = vpack.c.b16 %v1483, %v1482
  %v1723 = vpack.c.b16 %v1485, %v1484
  %v1724 = vpack.c.b16 %v1487, %v1486
  %v1725 = vpack.c.b16 %v1489, %v1488
  %v1726 = vpack.c.b16 %v1491, %v1490
  %v1727 = vpack.c.b16 %v1493, %v1492
  %v1728 = vpack.c.b16 %v1495, %v1494
  %v1729 = vpack.c.b16 %v1497, %v1496
  %v1730 = vpack.c.b16 %v1499, %v1498
  %v1731 = vpack.c.b16 %v1501, %v1500
  %v1732 = vpack.c.b16 %v1503, %v1502
  %v1733 = vpack.c.b16 %v1505, %v1504
  %v1734 = vpack.c.b16 %v1507, %v1506
  %v1735 = vpack.c.b16 %v1509, %v1508
  %v1736 = vpack.c.b16 %v1511, %v1510
  %v1737 = vpack.c.b16 %v1513, %v1512
  %v1738 = vpack.c.b16 %v1515, %v1514
  %v1739 = vpack.c.b16 %v1517, %v1516
  %v1740 = vpack.c.b16 %v1519, %v1518
  %v1741 = vpack.c.b16 %v1521, %v1520
  %v1742 = vpack.c.b16 %v1523, %v1522
  %v1743 = vpack.c.b16 %v1525, %v1524
  %v1744 = vpack.c.b16 %v1527, %v1526
  %v1745 = vpack.c.b16 %v1529, %v1528
  %v1746 = vpack.c.b16 %v1531, %v1530
  %v1747 = vpack.c.b16 %v1533, %v1532
  %v1748 = vpack.c.b16 %v1535, %v1534
  %v1749 = vpack.c.b16 %v1537, %v1536
  %v1750 = vpack.c.b16 %v1539, %v1538
  %v1751 = vpack.c.b16 %v1541, %v1540
  %v1752 = vpack.c.b16 %v1543, %v1542
  %v1753 = vpack.c.b16 %v1545, %v1544
  %v1754 = vpack.c.b16 %v1547, %v1546
  %v1755 = vpack.c.b16 %v1549, %v1548
  %v1756 = vpack.c.b16 %v1551, %v1550
  %v1757 = vpack.c.b16 %v1553, %v1552
  %v1758 = vpack.c.b16 %v1555, %v1554
  %v1759 = vpack.c.b16 %v1557, %v1556
  %v1760 = vpack.c.b16 %v1559, %v1558
  %v1761 = vpack.c.b16 %v1561, %v1560
  %v1762 = vpack.c.b16 %v1563, %v1562
  %v1763 = vpack.c.b16 %v1565, %v1564
  %v1764 = vpack.c.b16 %v1567, %v1566
  %v1765 = vpack.c.b16 %v1569, %v1568
  %v1766 = vpack.c.b16 %v1571, %v1570
  %v1767 = vpack.c.b16 %v1573, %v1572
  %v1768 = vpack.c.b16 %v1575, %v1574
  %v1769 = vpack.c.b16 %v1577, %v1576
  %v1770 = vpack.c.b16 %v1579, %v1578
  %v1771 = vpack.c.b16 %v1581, %v1580
  %v1772 = vpack.c.b16 %v1583, %v1582
  %v1773 = vpack.c.b16 %v1585, %v1584
  %v1774 = vpack.c.b16 %v1587, %v1586
  %v1775 = vpack.c.b16 %v1589, %v1588
  %v1776 = vpack.c.b16 %v1591, %v1590
  %v1777 = vpack.c.b16 %v1593, %v1592
  %v1778 = vpack.c.b16 %v1595, %v1594
  %v1779 = vpack.c.b16 %v1597, %v1596
  %v1780 = vpack.c.b16 %v1599, %v1598
  %v1781 = vpack.c.b16 %v1601, %v1600
  %v1782 = vpack.c.b16 %v1603, %v1602
  %v1783 = vpack.c.b16 %v1605, %v1604
  %v1784 = vpack.c.b16 %v1607, %v1606
  %v1785 = vpack.c.b16 %v1609, %v1608
  %1962 = vmatpush.bf16.msra.mxu0 %v1617
  %1963 = vmatpush.bf16.msra.mxu0 %v1616
  %1964 = vmatpush.bf16.msra.mxu0 %v1615
  %1965 = vmatpush.bf16.msra.mxu0 %v1614
  %1966 = vmatpush.bf16.msra.mxu0 %v1613
  %1967 = vmatpush.bf16.msra.mxu0 %v1612
  %1968 = vmatpush.bf16.msra.mxu0 %v1611
  %1969 = vmatpush.bf16.msra.mxu0 %v1610
  %1970 = vmatmul.bf16.gmra.mxu0 %v730
  %v1971 = vpop.f32.mrf.mxu0
  %v1972 = vadd.f32 %v465, %v1971
  %v1973 = vpop.f32.mrf.mxu0
  %v1974 = vadd.f32 %v465, %v1973
  %1975 = vmatmul.bf16.gmra.mxu0 %v752
  %v1976 = vpop.f32.mrf.mxu0
  %v1977 = vadd.f32 %v465, %v1976
  %v1978 = vpop.f32.mrf.mxu0
  %v1979 = vadd.f32 %v465, %v1978
  %1980 = vmatmul.bf16.gmra.mxu0 %v774
  %v1981 = vpop.f32.mrf.mxu0
  %v1982 = vadd.f32 %v465, %v1981
  %v1983 = vpop.f32.mrf.mxu0
  %v1984 = vadd.f32 %v465, %v1983
  %1985 = vmatmul.bf16.gmra.mxu0 %v796
  %v1986 = vpop.f32.mrf.mxu0
  %v1987 = vadd.f32 %v465, %v1986
  %v1988 = vpop.f32.mrf.mxu0
  %v1989 = vadd.f32 %v465, %v1988
  %1990 = vdwg.mxu0
  %1991 = vmatpush.bf16.msra.mxu0 %v1625
  %1992 = vmatpush.bf16.msra.mxu0 %v1624
  %1993 = vmatpush.bf16.msra.mxu0 %v1623
  %1994 = vmatpush.bf16.msra.mxu0 %v1622
  %1995 = vmatpush.bf16.msra.mxu0 %v1621
  %1996 = vmatpush.bf16.msra.mxu0 %v1620
  %1997 = vmatpush.bf16.msra.mxu0 %v1619
  %1998 = vmatpush.bf16.msra.mxu0 %v1618
  %1999 = vmatmul.bf16.gmra.mxu0 %v731
  %v2000 = vpop.f32.mrf.mxu0
  %v2001 = vadd.f32 %v1972, %v2000
  %v2002 = vpop.f32.mrf.mxu0
  %v2003 = vadd.f32 %v1974, %v2002
  %2004 = vmatmul.bf16.gmra.mxu0 %v753
  %v2005 = vpop.f32.mrf.mxu0
  %v2006 = vadd.f32 %v1977, %v2005
  %v2007 = vpop.f32.mrf.mxu0
  %v2008 = vadd.f32 %v1979, %v2007
  %2009 = vmatmul.bf16.gmra.mxu0 %v775
  %v2010 = vpop.f32.mrf.mxu0
  %v2011 = vadd.f32 %v1982, %v2010
  %v2012 = vpop.f32.mrf.mxu0
  %v2013 = vadd.f32 %v1984, %v2012
  %2014 = vmatmul.bf16.gmra.mxu0 %v797
  %v2015 = vpop.f32.mrf.mxu0
  %v2016 = vadd.f32 %v1987, %v2015
  %v2017 = vpop.f32.mrf.mxu0
  %v2018 = vadd.f32 %v1989, %v2017
  %2019 = vdwg.mxu0
  %2020 = vmatpush.bf16.msra.mxu0 %v1633
  %2021 = vmatpush.bf16.msra.mxu0 %v1632
  %2022 = vmatpush.bf16.msra.mxu0 %v1631
  %2023 = vmatpush.bf16.msra.mxu0 %v1630
  %2024 = vmatpush.bf16.msra.mxu0 %v1629
  %2025 = vmatpush.bf16.msra.mxu0 %v1628
  %2026 = vmatpush.bf16.msra.mxu0 %v1627
  %2027 = vmatpush.bf16.msra.mxu0 %v1626
  %2028 = vmatmul.bf16.gmra.mxu0 %v732
  %v2029 = vpop.f32.mrf.mxu0
  %v2030 = vadd.f32 %v2001, %v2029
  %v2031 = vpop.f32.mrf.mxu0
  %v2032 = vadd.f32 %v2003, %v2031
  %2033 = vmatmul.bf16.gmra.mxu0 %v754
  %v2034 = vpop.f32.mrf.mxu0
  %v2035 = vadd.f32 %v2006, %v2034
  %v2036 = vpop.f32.mrf.mxu0
  %v2037 = vadd.f32 %v2008, %v2036
  %2038 = vmatmul.bf16.gmra.mxu0 %v776
  %v2039 = vpop.f32.mrf.mxu0
  %v2040 = vadd.f32 %v2011, %v2039
  %v2041 = vpop.f32.mrf.mxu0
  %v2042 = vadd.f32 %v2013, %v2041
  %2043 = vmatmul.bf16.gmra.mxu0 %v798
  %v2044 = vpop.f32.mrf.mxu0
  %v2045 = vadd.f32 %v2016, %v2044
  %v2046 = vpop.f32.mrf.mxu0
  %v2047 = vadd.f32 %v2018, %v2046
  %2048 = vdwg.mxu0
  %2049 = vmatpush.bf16.msra.mxu0 %v1641
  %2050 = vmatpush.bf16.msra.mxu0 %v1640
  %2051 = vmatpush.bf16.msra.mxu0 %v1639
  %2052 = vmatpush.bf16.msra.mxu0 %v1638
  %2053 = vmatpush.bf16.msra.mxu0 %v1637
  %2054 = vmatpush.bf16.msra.mxu0 %v1636
  %2055 = vmatpush.bf16.msra.mxu0 %v1635
  %2056 = vmatpush.bf16.msra.mxu0 %v1634
  %2057 = vmatmul.bf16.gmra.mxu0 %v733
  %v2058 = vpop.f32.mrf.mxu0
  %v2059 = vadd.f32 %v2030, %v2058
  %v2060 = vpop.f32.mrf.mxu0
  %v2061 = vadd.f32 %v2032, %v2060
  %2062 = vmatmul.bf16.gmra.mxu0 %v755
  %v2063 = vpop.f32.mrf.mxu0
  %v2064 = vadd.f32 %v2035, %v2063
  %v2065 = vpop.f32.mrf.mxu0
  %v2066 = vadd.f32 %v2037, %v2065
  %2067 = vmatmul.bf16.gmra.mxu0 %v777
  %v2068 = vpop.f32.mrf.mxu0
  %v2069 = vadd.f32 %v2040, %v2068
  %v2070 = vpop.f32.mrf.mxu0
  %v2071 = vadd.f32 %v2042, %v2070
  %2072 = vmatmul.bf16.gmra.mxu0 %v799
  %v2073 = vpop.f32.mrf.mxu0
  %v2074 = vadd.f32 %v2045, %v2073
  %v2075 = vpop.f32.mrf.mxu0
  %v2076 = vadd.f32 %v2047, %v2075
  %2077 = vdwg.mxu0
  %2078 = vmatpush.bf16.msra.mxu0 %v1649
  %2079 = vmatpush.bf16.msra.mxu0 %v1648
  %2080 = vmatpush.bf16.msra.mxu0 %v1647
  %2081 = vmatpush.bf16.msra.mxu0 %v1646
  %2082 = vmatpush.bf16.msra.mxu0 %v1645
  %2083 = vmatpush.bf16.msra.mxu0 %v1644
  %2084 = vmatpush.bf16.msra.mxu0 %v1643
  %2085 = vmatpush.bf16.msra.mxu0 %v1642
  %2086 = vmatmul.bf16.gmra.mxu0 %v734
  %v2087 = vpop.f32.mrf.mxu0
  %v2088 = vadd.f32 %v2059, %v2087
  %v2089 = vpop.f32.mrf.mxu0
  %v2090 = vadd.f32 %v2061, %v2089
  %2091 = vmatmul.bf16.gmra.mxu0 %v756
  %v2092 = vpop.f32.mrf.mxu0
  %v2093 = vadd.f32 %v2064, %v2092
  %v2094 = vpop.f32.mrf.mxu0
  %v2095 = vadd.f32 %v2066, %v2094
  %2096 = vmatmul.bf16.gmra.mxu0 %v778
  %v2097 = vpop.f32.mrf.mxu0
  %v2098 = vadd.f32 %v2069, %v2097
  %v2099 = vpop.f32.mrf.mxu0
  %v2100 = vadd.f32 %v2071, %v2099
  %2101 = vmatmul.bf16.gmra.mxu0 %v800
  %v2102 = vpop.f32.mrf.mxu0
  %v2103 = vadd.f32 %v2074, %v2102
  %v2104 = vpop.f32.mrf.mxu0
  %v2105 = vadd.f32 %v2076, %v2104
  %2106 = vdwg.mxu0
  %2107 = vmatpush.bf16.msra.mxu0 %v1657
  %2108 = vmatpush.bf16.msra.mxu0 %v1656
  %2109 = vmatpush.bf16.msra.mxu0 %v1655
  %2110 = vmatpush.bf16.msra.mxu0 %v1654
  %2111 = vmatpush.bf16.msra.mxu0 %v1653
  %2112 = vmatpush.bf16.msra.mxu0 %v1652
  %2113 = vmatpush.bf16.msra.mxu0 %v1651
  %2114 = vmatpush.bf16.msra.mxu0 %v1650
  %2115 = vmatmul.bf16.gmra.mxu0 %v735
  %v2116 = vpop.f32.mrf.mxu0
  %v2117 = vadd.f32 %v2088, %v2116
  %v2118 = vpop.f32.mrf.mxu0
  %v2119 = vadd.f32 %v2090, %v2118
  %2120 = vmatmul.bf16.gmra.mxu0 %v757
  %v2121 = vpop.f32.mrf.mxu0
  %v2122 = vadd.f32 %v2093, %v2121
  %v2123 = vpop.f32.mrf.mxu0
  %v2124 = vadd.f32 %v2095, %v2123
  %2125 = vmatmul.bf16.gmra.mxu0 %v779
  %v2126 = vpop.f32.mrf.mxu0
  %v2127 = vadd.f32 %v2098, %v2126
  %v2128 = vpop.f32.mrf.mxu0
  %v2129 = vadd.f32 %v2100, %v2128
  %2130 = vmatmul.bf16.gmra.mxu0 %v801
  %v2131 = vpop.f32.mrf.mxu0
  %v2132 = vadd.f32 %v2103, %v2131
  %v2133 = vpop.f32.mrf.mxu0
  %v2134 = vadd.f32 %v2105, %v2133
  %2135 = vdwg.mxu0
  %2136 = vmatpush.bf16.msra.mxu0 %v1665
  %2137 = vmatpush.bf16.msra.mxu0 %v1664
  %2138 = vmatpush.bf16.msra.mxu0 %v1663
  %2139 = vmatpush.bf16.msra.mxu0 %v1662
  %2140 = vmatpush.bf16.msra.mxu0 %v1661
  %2141 = vmatpush.bf16.msra.mxu0 %v1660
  %2142 = vmatpush.bf16.msra.mxu0 %v1659
  %2143 = vmatpush.bf16.msra.mxu0 %v1658
  %2144 = vmatmul.bf16.gmra.mxu0 %v736
  %v2145 = vpop.f32.mrf.mxu0
  %v2146 = vadd.f32 %v2117, %v2145
  %v2147 = vpop.f32.mrf.mxu0
  %v2148 = vadd.f32 %v2119, %v2147
  %2149 = vmatmul.bf16.gmra.mxu0 %v758
  %v2150 = vpop.f32.mrf.mxu0
  %v2151 = vadd.f32 %v2122, %v2150
  %v2152 = vpop.f32.mrf.mxu0
  %v2153 = vadd.f32 %v2124, %v2152
  %2154 = vmatmul.bf16.gmra.mxu0 %v780
  %v2155 = vpop.f32.mrf.mxu0
  %v2156 = vadd.f32 %v2127, %v2155
  %v2157 = vpop.f32.mrf.mxu0
  %v2158 = vadd.f32 %v2129, %v2157
  %2159 = vmatmul.bf16.gmra.mxu0 %v802
  %v2160 = vpop.f32.mrf.mxu0
  %v2161 = vadd.f32 %v2132, %v2160
  %v2162 = vpop.f32.mrf.mxu0
  %v2163 = vadd.f32 %v2134, %v2162
  %2164 = vdwg.mxu0
  %2165 = vmatpush.bf16.msra.mxu0 %v1673
  %2166 = vmatpush.bf16.msra.mxu0 %v1672
  %2167 = vmatpush.bf16.msra.mxu0 %v1671
  %2168 = vmatpush.bf16.msra.mxu0 %v1670
  %2169 = vmatpush.bf16.msra.mxu0 %v1669
  %2170 = vmatpush.bf16.msra.mxu0 %v1668
  %2171 = vmatpush.bf16.msra.mxu0 %v1667
  %2172 = vmatpush.bf16.msra.mxu0 %v1666
  %2173 = vmatmul.bf16.gmra.mxu0 %v737
  %v2174 = vpop.f32.mrf.mxu0
  %v2175 = vadd.f32 %v2146, %v2174
  %v2176 = vpop.f32.mrf.mxu0
  %v2177 = vadd.f32 %v2148, %v2176
  %2178 = vmatmul.bf16.gmra.mxu0 %v759
  %v2179 = vpop.f32.mrf.mxu0
  %v2180 = vadd.f32 %v2151, %v2179
  %v2181 = vpop.f32.mrf.mxu0
  %v2182 = vadd.f32 %v2153, %v2181
  %2183 = vmatmul.bf16.gmra.mxu0 %v781
  %v2184 = vpop.f32.mrf.mxu0
  %v2185 = vadd.f32 %v2156, %v2184
  %v2186 = vpop.f32.mrf.mxu0
  %v2187 = vadd.f32 %v2158, %v2186
  %2188 = vmatmul.bf16.gmra.mxu0 %v803
  %v2189 = vpop.f32.mrf.mxu0
  %v2190 = vadd.f32 %v2161, %v2189
  %v2191 = vpop.f32.mrf.mxu0
  %v2192 = vadd.f32 %v2163, %v2191
  %2193 = vdwg.mxu0
  %2194 = vmatpush.bf16.msra.mxu0 %v1681
  %2195 = vmatpush.bf16.msra.mxu0 %v1680
  %2196 = vmatpush.bf16.msra.mxu0 %v1679
  %2197 = vmatpush.bf16.msra.mxu0 %v1678
  %2198 = vmatpush.bf16.msra.mxu0 %v1677
  %2199 = vmatpush.bf16.msra.mxu0 %v1676
  %2200 = vmatpush.bf16.msra.mxu0 %v1675
  %2201 = vmatpush.bf16.msra.mxu0 %v1674
  %2202 = vmatmul.bf16.gmra.mxu0 %v738
  %v2203 = vpop.f32.mrf.mxu0
  %v2204 = vadd.f32 %v2175, %v2203
  %v2205 = vpop.f32.mrf.mxu0
  %v2206 = vadd.f32 %v2177, %v2205
  %2207 = vmatmul.bf16.gmra.mxu0 %v760
  %v2208 = vpop.f32.mrf.mxu0
  %v2209 = vadd.f32 %v2180, %v2208
  %v2210 = vpop.f32.mrf.mxu0
  %v2211 = vadd.f32 %v2182, %v2210
  %2212 = vmatmul.bf16.gmra.mxu0 %v782
  %v2213 = vpop.f32.mrf.mxu0
  %v2214 = vadd.f32 %v2185, %v2213
  %v2215 = vpop.f32.mrf.mxu0
  %v2216 = vadd.f32 %v2187, %v2215
  %2217 = vmatmul.bf16.gmra.mxu0 %v804
  %v2218 = vpop.f32.mrf.mxu0
  %v2219 = vadd.f32 %v2190, %v2218
  %v2220 = vpop.f32.mrf.mxu0
  %v2221 = vadd.f32 %v2192, %v2220
  %2222 = vdwg.mxu0
  %2223 = vmatpush.bf16.msra.mxu0 %v1689
  %2224 = vmatpush.bf16.msra.mxu0 %v1688
  %2225 = vmatpush.bf16.msra.mxu0 %v1687
  %2226 = vmatpush.bf16.msra.mxu0 %v1686
  %2227 = vmatpush.bf16.msra.mxu0 %v1685
  %2228 = vmatpush.bf16.msra.mxu0 %v1684
  %2229 = vmatpush.bf16.msra.mxu0 %v1683
  %2230 = vmatpush.bf16.msra.mxu0 %v1682
  %2231 = vmatmul.bf16.gmra.mxu0 %v739
  %v2232 = vpop.f32.mrf.mxu0
  %v2233 = vadd.f32 %v2204, %v2232
  %v2234 = vpop.f32.mrf.mxu0
  %v2235 = vadd.f32 %v2206, %v2234
  %2236 = vmatmul.bf16.gmra.mxu0 %v761
  %v2237 = vpop.f32.mrf.mxu0
  %v2238 = vadd.f32 %v2209, %v2237
  %v2239 = vpop.f32.mrf.mxu0
  %v2240 = vadd.f32 %v2211, %v2239
  %2241 = vmatmul.bf16.gmra.mxu0 %v783
  %v2242 = vpop.f32.mrf.mxu0
  %v2243 = vadd.f32 %v2214, %v2242
  %v2244 = vpop.f32.mrf.mxu0
  %v2245 = vadd.f32 %v2216, %v2244
  %2246 = vmatmul.bf16.gmra.mxu0 %v805
  %v2247 = vpop.f32.mrf.mxu0
  %v2248 = vadd.f32 %v2219, %v2247
  %v2249 = vpop.f32.mrf.mxu0
  %v2250 = vadd.f32 %v2221, %v2249
  %2251 = vdwg.mxu0
  %2252 = vmatpush.bf16.msra.mxu0 %v1697
  %2253 = vmatpush.bf16.msra.mxu0 %v1696
  %2254 = vmatpush.bf16.msra.mxu0 %v1695
  %2255 = vmatpush.bf16.msra.mxu0 %v1694
  %2256 = vmatpush.bf16.msra.mxu0 %v1693
  %2257 = vmatpush.bf16.msra.mxu0 %v1692
  %2258 = vmatpush.bf16.msra.mxu0 %v1691
  %2259 = vmatpush.bf16.msra.mxu0 %v1690
  %2260 = vmatmul.bf16.gmra.mxu0 %v740
  %v2261 = vpop.f32.mrf.mxu0
  %v2262 = vadd.f32 %v2233, %v2261
  %v2263 = vpop.f32.mrf.mxu0
  %v2264 = vadd.f32 %v2235, %v2263
  %2265 = vmatmul.bf16.gmra.mxu0 %v762
  %v2266 = vpop.f32.mrf.mxu0
  %v2267 = vadd.f32 %v2238, %v2266
  %v2268 = vpop.f32.mrf.mxu0
  %v2269 = vadd.f32 %v2240, %v2268
  %2270 = vmatmul.bf16.gmra.mxu0 %v784
  %v2271 = vpop.f32.mrf.mxu0
  %v2272 = vadd.f32 %v2243, %v2271
  %v2273 = vpop.f32.mrf.mxu0
  %v2274 = vadd.f32 %v2245, %v2273
  %2275 = vmatmul.bf16.gmra.mxu0 %v806
  %v2276 = vpop.f32.mrf.mxu0
  %v2277 = vadd.f32 %v2248, %v2276
  %v2278 = vpop.f32.mrf.mxu0
  %v2279 = vadd.f32 %v2250, %v2278
  %2280 = vdwg.mxu0
  %2281 = vmatpush.bf16.msra.mxu0 %v1705
  %2282 = vmatpush.bf16.msra.mxu0 %v1704
  %2283 = vmatpush.bf16.msra.mxu0 %v1703
  %2284 = vmatpush.bf16.msra.mxu0 %v1702
  %2285 = vmatpush.bf16.msra.mxu0 %v1701
  %2286 = vmatpush.bf16.msra.mxu0 %v1700
  %2287 = vmatpush.bf16.msra.mxu0 %v1699
  %2288 = vmatpush.bf16.msra.mxu0 %v1698
  %2289 = vmatmul.bf16.gmra.mxu0 %v741
  %v2290 = vpop.f32.mrf.mxu0
  %v2291 = vadd.f32 %v2262, %v2290
  %v2292 = vpop.f32.mrf.mxu0
  %v2293 = vadd.f32 %v2264, %v2292
  %2294 = vmatmul.bf16.gmra.mxu0 %v763
  %v2295 = vpop.f32.mrf.mxu0
  %v2296 = vadd.f32 %v2267, %v2295
  %v2297 = vpop.f32.mrf.mxu0
  %v2298 = vadd.f32 %v2269, %v2297
  %2299 = vmatmul.bf16.gmra.mxu0 %v785
  %v2300 = vpop.f32.mrf.mxu0
  %v2301 = vadd.f32 %v2272, %v2300
  %v2302 = vpop.f32.mrf.mxu0
  %v2303 = vadd.f32 %v2274, %v2302
  %2304 = vmatmul.bf16.gmra.mxu0 %v807
  %v2305 = vpop.f32.mrf.mxu0
  %v2306 = vadd.f32 %v2277, %v2305
  %v2307 = vpop.f32.mrf.mxu0
  %v2308 = vadd.f32 %v2279, %v2307
  %2309 = vdwg.mxu0
  %2310 = vmatpush.bf16.msra.mxu0 %v1713
  %2311 = vmatpush.bf16.msra.mxu0 %v1712
  %2312 = vmatpush.bf16.msra.mxu0 %v1711
  %2313 = vmatpush.bf16.msra.mxu0 %v1710
  %2314 = vmatpush.bf16.msra.mxu0 %v1709
  %2315 = vmatpush.bf16.msra.mxu0 %v1708
  %2316 = vmatpush.bf16.msra.mxu0 %v1707
  %2317 = vmatpush.bf16.msra.mxu0 %v1706
  %2318 = vmatmul.bf16.gmra.mxu0 %v742
  %v2319 = vpop.f32.mrf.mxu0
  %v2320 = vadd.f32 %v2291, %v2319
  %v2321 = vpop.f32.mrf.mxu0
  %v2322 = vadd.f32 %v2293, %v2321
  %2323 = vmatmul.bf16.gmra.mxu0 %v764
  %v2324 = vpop.f32.mrf.mxu0
  %v2325 = vadd.f32 %v2296, %v2324
  %v2326 = vpop.f32.mrf.mxu0
  %v2327 = vadd.f32 %v2298, %v2326
  %2328 = vmatmul.bf16.gmra.mxu0 %v786
  %v2329 = vpop.f32.mrf.mxu0
  %v2330 = vadd.f32 %v2301, %v2329
  %v2331 = vpop.f32.mrf.mxu0
  %v2332 = vadd.f32 %v2303, %v2331
  %2333 = vmatmul.bf16.gmra.mxu0 %v808
  %v2334 = vpop.f32.mrf.mxu0
  %v2335 = vadd.f32 %v2306, %v2334
  %v2336 = vpop.f32.mrf.mxu0
  %v2337 = vadd.f32 %v2308, %v2336
  %2338 = vdwg.mxu0
  %2339 = vmatpush.bf16.msra.mxu0 %v1721
  %2340 = vmatpush.bf16.msra.mxu0 %v1720
  %2341 = vmatpush.bf16.msra.mxu0 %v1719
  %2342 = vmatpush.bf16.msra.mxu0 %v1718
  %2343 = vmatpush.bf16.msra.mxu0 %v1717
  %2344 = vmatpush.bf16.msra.mxu0 %v1716
  %2345 = vmatpush.bf16.msra.mxu0 %v1715
  %2346 = vmatpush.bf16.msra.mxu0 %v1714
  %2347 = vmatmul.bf16.gmra.mxu0 %v743
  %v2348 = vpop.f32.mrf.mxu0
  %v2349 = vadd.f32 %v2320, %v2348
  %v2350 = vpop.f32.mrf.mxu0
  %v2351 = vadd.f32 %v2322, %v2350
  %2352 = vmatmul.bf16.gmra.mxu0 %v765
  %v2353 = vpop.f32.mrf.mxu0
  %v2354 = vadd.f32 %v2325, %v2353
  %v2355 = vpop.f32.mrf.mxu0
  %v2356 = vadd.f32 %v2327, %v2355
  %2357 = vmatmul.bf16.gmra.mxu0 %v787
  %v2358 = vpop.f32.mrf.mxu0
  %v2359 = vadd.f32 %v2330, %v2358
  %v2360 = vpop.f32.mrf.mxu0
  %v2361 = vadd.f32 %v2332, %v2360
  %2362 = vmatmul.bf16.gmra.mxu0 %v809
  %v2363 = vpop.f32.mrf.mxu0
  %v2364 = vadd.f32 %v2335, %v2363
  %v2365 = vpop.f32.mrf.mxu0
  %v2366 = vadd.f32 %v2337, %v2365
  %2367 = vdwg.mxu0
  %2368 = vmatpush.bf16.msra.mxu0 %v1729
  %2369 = vmatpush.bf16.msra.mxu0 %v1728
  %2370 = vmatpush.bf16.msra.mxu0 %v1727
  %2371 = vmatpush.bf16.msra.mxu0 %v1726
  %2372 = vmatpush.bf16.msra.mxu0 %v1725
  %2373 = vmatpush.bf16.msra.mxu0 %v1724
  %2374 = vmatpush.bf16.msra.mxu0 %v1723
  %2375 = vmatpush.bf16.msra.mxu0 %v1722
  %2376 = vmatmul.bf16.gmra.mxu0 %v744
  %v2377 = vpop.f32.mrf.mxu0
  %v2378 = vadd.f32 %v2349, %v2377
  %v2379 = vpop.f32.mrf.mxu0
  %v2380 = vadd.f32 %v2351, %v2379
  %2381 = vmatmul.bf16.gmra.mxu0 %v766
  %v2382 = vpop.f32.mrf.mxu0
  %v2383 = vadd.f32 %v2354, %v2382
  %v2384 = vpop.f32.mrf.mxu0
  %v2385 = vadd.f32 %v2356, %v2384
  %2386 = vmatmul.bf16.gmra.mxu0 %v788
  %v2387 = vpop.f32.mrf.mxu0
  %v2388 = vadd.f32 %v2359, %v2387
  %v2389 = vpop.f32.mrf.mxu0
  %v2390 = vadd.f32 %v2361, %v2389
  %2391 = vmatmul.bf16.gmra.mxu0 %v810
  %v2392 = vpop.f32.mrf.mxu0
  %v2393 = vadd.f32 %v2364, %v2392
  %v2394 = vpop.f32.mrf.mxu0
  %v2395 = vadd.f32 %v2366, %v2394
  %2396 = vdwg.mxu0
  %2397 = vmatpush.bf16.msra.mxu0 %v1737
  %2398 = vmatpush.bf16.msra.mxu0 %v1736
  %2399 = vmatpush.bf16.msra.mxu0 %v1735
  %2400 = vmatpush.bf16.msra.mxu0 %v1734
  %2401 = vmatpush.bf16.msra.mxu0 %v1733
  %2402 = vmatpush.bf16.msra.mxu0 %v1732
  %2403 = vmatpush.bf16.msra.mxu0 %v1731
  %2404 = vmatpush.bf16.msra.mxu0 %v1730
  %2405 = vmatmul.bf16.gmra.mxu0 %v745
  %v2406 = vpop.f32.mrf.mxu0
  %v2407 = vadd.f32 %v2378, %v2406
  %v2408 = vpop.f32.mrf.mxu0
  %v2409 = vadd.f32 %v2380, %v2408
  %2410 = vmatmul.bf16.gmra.mxu0 %v767
  %v2411 = vpop.f32.mrf.mxu0
  %v2412 = vadd.f32 %v2383, %v2411
  %v2413 = vpop.f32.mrf.mxu0
  %v2414 = vadd.f32 %v2385, %v2413
  %2415 = vmatmul.bf16.gmra.mxu0 %v789
  %v2416 = vpop.f32.mrf.mxu0
  %v2417 = vadd.f32 %v2388, %v2416
  %v2418 = vpop.f32.mrf.mxu0
  %v2419 = vadd.f32 %v2390, %v2418
  %2420 = vmatmul.bf16.gmra.mxu0 %v811
  %v2421 = vpop.f32.mrf.mxu0
  %v2422 = vadd.f32 %v2393, %v2421
  %v2423 = vpop.f32.mrf.mxu0
  %v2424 = vadd.f32 %v2395, %v2423
  %2425 = vdwg.mxu0
  %2426 = vmatpush.bf16.msra.mxu0 %v1745
  %2427 = vmatpush.bf16.msra.mxu0 %v1744
  %2428 = vmatpush.bf16.msra.mxu0 %v1743
  %2429 = vmatpush.bf16.msra.mxu0 %v1742
  %2430 = vmatpush.bf16.msra.mxu0 %v1741
  %2431 = vmatpush.bf16.msra.mxu0 %v1740
  %2432 = vmatpush.bf16.msra.mxu0 %v1739
  %2433 = vmatpush.bf16.msra.mxu0 %v1738
  %2434 = vmatmul.bf16.gmra.mxu0 %v746
  %v2435 = vpop.f32.mrf.mxu0
  %v2436 = vadd.f32 %v2407, %v2435
  %v2437 = vpop.f32.mrf.mxu0
  %v2438 = vadd.f32 %v2409, %v2437
  %2439 = vmatmul.bf16.gmra.mxu0 %v768
  %v2440 = vpop.f32.mrf.mxu0
  %v2441 = vadd.f32 %v2412, %v2440
  %v2442 = vpop.f32.mrf.mxu0
  %v2443 = vadd.f32 %v2414, %v2442
  %2444 = vmatmul.bf16.gmra.mxu0 %v790
  %v2445 = vpop.f32.mrf.mxu0
  %v2446 = vadd.f32 %v2417, %v2445
  %v2447 = vpop.f32.mrf.mxu0
  %v2448 = vadd.f32 %v2419, %v2447
  %2449 = vmatmul.bf16.gmra.mxu0 %v812
  %v2450 = vpop.f32.mrf.mxu0
  %v2451 = vadd.f32 %v2422, %v2450
  %v2452 = vpop.f32.mrf.mxu0
  %v2453 = vadd.f32 %v2424, %v2452
  %2454 = vdwg.mxu0
  %2455 = vmatpush.bf16.msra.mxu0 %v1753
  %2456 = vmatpush.bf16.msra.mxu0 %v1752
  %2457 = vmatpush.bf16.msra.mxu0 %v1751
  %2458 = vmatpush.bf16.msra.mxu0 %v1750
  %2459 = vmatpush.bf16.msra.mxu0 %v1749
  %2460 = vmatpush.bf16.msra.mxu0 %v1748
  %2461 = vmatpush.bf16.msra.mxu0 %v1747
  %2462 = vmatpush.bf16.msra.mxu0 %v1746
  %2463 = vmatmul.bf16.gmra.mxu0 %v747
  %v2464 = vpop.f32.mrf.mxu0
  %v2465 = vadd.f32 %v2436, %v2464
  %v2466 = vpop.f32.mrf.mxu0
  %v2467 = vadd.f32 %v2438, %v2466
  %2468 = vmatmul.bf16.gmra.mxu0 %v769
  %v2469 = vpop.f32.mrf.mxu0
  %v2470 = vadd.f32 %v2441, %v2469
  %v2471 = vpop.f32.mrf.mxu0
  %v2472 = vadd.f32 %v2443, %v2471
  %2473 = vmatmul.bf16.gmra.mxu0 %v791
  %v2474 = vpop.f32.mrf.mxu0
  %v2475 = vadd.f32 %v2446, %v2474
  %v2476 = vpop.f32.mrf.mxu0
  %v2477 = vadd.f32 %v2448, %v2476
  %2478 = vmatmul.bf16.gmra.mxu0 %v813
  %v2479 = vpop.f32.mrf.mxu0
  %v2480 = vadd.f32 %v2451, %v2479
  %v2481 = vpop.f32.mrf.mxu0
  %v2482 = vadd.f32 %v2453, %v2481
  %2483 = vdwg.mxu0
  %2484 = vmatpush.bf16.msra.mxu0 %v1761
  %2485 = vmatpush.bf16.msra.mxu0 %v1760
  %2486 = vmatpush.bf16.msra.mxu0 %v1759
  %2487 = vmatpush.bf16.msra.mxu0 %v1758
  %2488 = vmatpush.bf16.msra.mxu0 %v1757
  %2489 = vmatpush.bf16.msra.mxu0 %v1756
  %2490 = vmatpush.bf16.msra.mxu0 %v1755
  %2491 = vmatpush.bf16.msra.mxu0 %v1754
  %2492 = vmatmul.bf16.gmra.mxu0 %v748
  %v2493 = vpop.f32.mrf.mxu0
  %v2494 = vadd.f32 %v2465, %v2493
  %v2495 = vpop.f32.mrf.mxu0
  %v2496 = vadd.f32 %v2467, %v2495
  %2497 = vmatmul.bf16.gmra.mxu0 %v770
  %v2498 = vpop.f32.mrf.mxu0
  %v2499 = vadd.f32 %v2470, %v2498
  %v2500 = vpop.f32.mrf.mxu0
  %v2501 = vadd.f32 %v2472, %v2500
  %2502 = vmatmul.bf16.gmra.mxu0 %v792
  %v2503 = vpop.f32.mrf.mxu0
  %v2504 = vadd.f32 %v2475, %v2503
  %v2505 = vpop.f32.mrf.mxu0
  %v2506 = vadd.f32 %v2477, %v2505
  %2507 = vmatmul.bf16.gmra.mxu0 %v814
  %v2508 = vpop.f32.mrf.mxu0
  %v2509 = vadd.f32 %v2480, %v2508
  %v2510 = vpop.f32.mrf.mxu0
  %v2511 = vadd.f32 %v2482, %v2510
  %2512 = vdwg.mxu0
  %2513 = vmatpush.bf16.msra.mxu0 %v1769
  %2514 = vmatpush.bf16.msra.mxu0 %v1768
  %2515 = vmatpush.bf16.msra.mxu0 %v1767
  %2516 = vmatpush.bf16.msra.mxu0 %v1766
  %2517 = vmatpush.bf16.msra.mxu0 %v1765
  %2518 = vmatpush.bf16.msra.mxu0 %v1764
  %2519 = vmatpush.bf16.msra.mxu0 %v1763
  %2520 = vmatpush.bf16.msra.mxu0 %v1762
  %2521 = vmatmul.bf16.gmra.mxu0 %v749
  %v2522 = vpop.f32.mrf.mxu0
  %v2523 = vadd.f32 %v2494, %v2522
  %v2524 = vpop.f32.mrf.mxu0
  %v2525 = vadd.f32 %v2496, %v2524
  %2526 = vmatmul.bf16.gmra.mxu0 %v771
  %v2527 = vpop.f32.mrf.mxu0
  %v2528 = vadd.f32 %v2499, %v2527
  %v2529 = vpop.f32.mrf.mxu0
  %v2530 = vadd.f32 %v2501, %v2529
  %2531 = vmatmul.bf16.gmra.mxu0 %v793
  %v2532 = vpop.f32.mrf.mxu0
  %v2533 = vadd.f32 %v2504, %v2532
  %v2534 = vpop.f32.mrf.mxu0
  %v2535 = vadd.f32 %v2506, %v2534
  %2536 = vmatmul.bf16.gmra.mxu0 %v815
  %v2537 = vpop.f32.mrf.mxu0
  %v2538 = vadd.f32 %v2509, %v2537
  %v2539 = vpop.f32.mrf.mxu0
  %v2540 = vadd.f32 %v2511, %v2539
  %2541 = vdwg.mxu0
  %2542 = vmatpush.bf16.msra.mxu0 %v1777
  %2543 = vmatpush.bf16.msra.mxu0 %v1776
  %2544 = vmatpush.bf16.msra.mxu0 %v1775
  %2545 = vmatpush.bf16.msra.mxu0 %v1774
  %2546 = vmatpush.bf16.msra.mxu0 %v1773
  %2547 = vmatpush.bf16.msra.mxu0 %v1772
  %2548 = vmatpush.bf16.msra.mxu0 %v1771
  %2549 = vmatpush.bf16.msra.mxu0 %v1770
  %2550 = vmatmul.bf16.gmra.mxu0 %v750
  %v2551 = vpop.f32.mrf.mxu0
  %v2552 = vadd.f32 %v2523, %v2551
  %v2553 = vpop.f32.mrf.mxu0
  %v2554 = vadd.f32 %v2525, %v2553
  %2555 = vmatmul.bf16.gmra.mxu0 %v772
  %v2556 = vpop.f32.mrf.mxu0
  %v2557 = vadd.f32 %v2528, %v2556
  %v2558 = vpop.f32.mrf.mxu0
  %v2559 = vadd.f32 %v2530, %v2558
  %2560 = vmatmul.bf16.gmra.mxu0 %v794
  %v2561 = vpop.f32.mrf.mxu0
  %v2562 = vadd.f32 %v2533, %v2561
  %v2563 = vpop.f32.mrf.mxu0
  %v2564 = vadd.f32 %v2535, %v2563
  %2565 = vmatmul.bf16.gmra.mxu0 %v816
  %v2566 = vpop.f32.mrf.mxu0
  %v2567 = vadd.f32 %v2538, %v2566
  %v2568 = vpop.f32.mrf.mxu0
  %v2569 = vadd.f32 %v2540, %v2568
  %2570 = vdwg.mxu0
  %2571 = vmatpush.bf16.msra.mxu0 %v1785
  %2572 = vmatpush.bf16.msra.mxu0 %v1784
  %2573 = vmatpush.bf16.msra.mxu0 %v1783
  %2574 = vmatpush.bf16.msra.mxu0 %v1782
  %2575 = vmatpush.bf16.msra.mxu0 %v1781
  %2576 = vmatpush.bf16.msra.mxu0 %v1780
  %2577 = vmatpush.bf16.msra.mxu0 %v1779
  %2578 = vmatpush.bf16.msra.mxu0 %v1778
  %2579 = vmatmul.bf16.gmra.mxu0 %v751
  %v2580 = vpop.f32.mrf.mxu0
  %v2581 = vadd.f32 %v2552, %v2580
  %v2582 = vpop.f32.mrf.mxu0
  %v2583 = vadd.f32 %v2554, %v2582
  %2584 = vmatmul.bf16.gmra.mxu0 %v773
  %v2585 = vpop.f32.mrf.mxu0
  %v2586 = vadd.f32 %v2557, %v2585
  %v2587 = vpop.f32.mrf.mxu0
  %v2588 = vadd.f32 %v2559, %v2587
  %2589 = vmatmul.bf16.gmra.mxu0 %v795
  %v2590 = vpop.f32.mrf.mxu0
  %v2591 = vadd.f32 %v2562, %v2590
  %v2592 = vpop.f32.mrf.mxu0
  %v2593 = vadd.f32 %v2564, %v2592
  %2594 = vmatmul.bf16.gmra.mxu0 %v817
  %v2595 = vpop.f32.mrf.mxu0
  %v2596 = vadd.f32 %v2567, %v2595
  %v2597 = vpop.f32.mrf.mxu0
  %v2598 = vadd.f32 %v2569, %v2597
  %2599 = vdwg.mxu0
  %vm2600 = vcmp.gt.f32.partialorder %v2581, 0.0
  %vm2601 = vcmp.gt.f32.partialorder %v2583, 0.0
  %vm2602 = vcmp.gt.f32.partialorder %v2586, 0.0
  %vm2603 = vcmp.gt.f32.partialorder %v2588, 0.0
  %vm2604 = vcmp.gt.f32.partialorder %v2591, 0.0
  %vm2605 = vcmp.gt.f32.partialorder %v2593, 0.0
  %vm2606 = vcmp.gt.f32.partialorder %v2596, 0.0
  %vm2607 = vcmp.gt.f32.partialorder %v2598, 0.0
  %v2608 = vmul.f32 %v2581, 1.442695
  %v2609 = vpow.pop %v2608
  %v2610 = vmul.f32 %v2583, 1.442695
  %v2611 = vpow.pop %v2610
  %v2612 = vmul.f32 %v2586, 1.442695
  %v2613 = vpow.pop %v2612
  %v2614 = vmul.f32 %v2588, 1.442695
  %v2615 = vpow.pop %v2614
  %v2616 = vmul.f32 %v2591, 1.442695
  %v2617 = vpow.pop %v2616
  %v2618 = vmul.f32 %v2593, 1.442695
  %v2619 = vpow.pop %v2618
  %v2620 = vmul.f32 %v2596, 1.442695
  %v2621 = vpow.pop %v2620
  %v2622 = vmul.f32 %v2598, 1.442695
  %v2623 = vpow.pop %v2622
  %v2624 = vsub.f32 %v2609, 1.0
  %v2625 = vsub.f32 %v2611, 1.0
  %v2626 = vsub.f32 %v2613, 1.0
  %v2627 = vsub.f32 %v2615, 1.0
  %v2628 = vsub.f32 %v2617, 1.0
  %v2629 = vsub.f32 %v2619, 1.0
  %v2630 = vsub.f32 %v2621, 1.0
  %v2631 = vsub.f32 %v2623, 1.0
  %v2632 = vmul.f32 %v2624, 1.6732632
  %v2633 = vmul.f32 %v2625, 1.6732632
  %v2634 = vmul.f32 %v2626, 1.6732632
  %v2635 = vmul.f32 %v2627, 1.6732632
  %v2636 = vmul.f32 %v2628, 1.6732632
  %v2637 = vmul.f32 %v2629, 1.6732632
  %v2638 = vmul.f32 %v2630, 1.6732632
  %v2639 = vmul.f32 %v2631, 1.6732632
  %v2640 = vsel %vm2600, %v2581, %v2632
  %v2641 = vsel %vm2601, %v2583, %v2633
  %v2642 = vsel %vm2602, %v2586, %v2634
  %v2643 = vsel %vm2603, %v2588, %v2635
  %v2644 = vsel %vm2604, %v2591, %v2636
  %v2645 = vsel %vm2605, %v2593, %v2637
  %v2646 = vsel %vm2606, %v2596, %v2638
  %v2647 = vsel %vm2607, %v2598, %v2639
  %v2648 = vmul.f32 %v2640, 1.050701
  %v2649 = vmul.f32 %v2641, 1.050701
  %v2650 = vmul.f32 %v2642, 1.050701
  %v2651 = vmul.f32 %v2643, 1.050701
  %v2652 = vmul.f32 %v2644, 1.050701
  %v2653 = vmul.f32 %v2645, 1.050701
  %v2654 = vmul.f32 %v2646, 1.050701
  %v2655 = vmul.f32 %v2647, 1.050701
  %vm2656 = vcmask 31744
  %v2658 = vsel %vm2656, %v2652, 0
  %v2661 = vsel %vm2656, %v2653, 0
  %v2664 = vsel %vm2656, %v2654, 0
  %v2667 = vsel %vm2656, %v2655, 0
  %vm2669 = vcmask 1043456
  %v2671 = vsel %vm2669, %v16, 0
  %2673 = vmatpush.msra.mxu0 0.0
  %2674 = vmatpush.msra.mxu0 0.0
  %2675 = vmatpush.msra.mxu0 0.0
  %2676 = vmatpush.msra.mxu0 0.0
  %2677 = vmatpush.msra.mxu0 0.0
  %2678 = vmatpush.msra.mxu0 0.0
  %2679 = vmatpush.msra.mxu0 0.0
  %2680 = vmatpush.msra.mxu0 0.0
  %2681 = vmatpush.msra.mxu0 0.0
  %2682 = vmatpush.msra.mxu0 0.0
  %2683 = vmatpush.msra.mxu0 0.0
  %2684 = vmatpush.msra.mxu0 0.0
  %2685 = vmatpush.msra.mxu0 0.0
  %2686 = vmatpush.msra.mxu0 0.0
  %2687 = vmatpush.msra.mxu0 0.0
  %2688 = vmatpush.msra.mxu0 %v2671
  %2689 = vmatmul.f32.gmra.mxu0 %v2658
  %v2690 = vpop.f32.mrf.mxu0
  %v2691 = vadd.f32 0.0, %v2690
  %2692 = vmatmul.f32.gmra.mxu0 %v2661
  %v2693 = vpop.f32.mrf.mxu0
  %v2694 = vadd.f32 0.0, %v2693
  %2695 = vmatmul.f32.gmra.mxu0 %v2664
  %v2696 = vpop.f32.mrf.mxu0
  %v2697 = vadd.f32 0.0, %v2696
  %2698 = vmatmul.f32.gmra.mxu0 %v2667
  %v2699 = vpop.f32.mrf.mxu0
  %v2700 = vadd.f32 0.0, %v2699
  %2701 = vdwg.mxu0
  %v2703 = vsel %vm2656, %v2648, 0
  %v2706 = vsel %vm2656, %v2649, 0
  %v2709 = vsel %vm2656, %v2650, 0
  %v2712 = vsel %vm2656, %v2651, 0
  %v2715 = vsel %vm2669, %v15, 0
  %2717 = vmatpush.msra.mxu0 0.0
  %2718 = vmatpush.msra.mxu0 0.0
  %2719 = vmatpush.msra.mxu0 0.0
  %2720 = vmatpush.msra.mxu0 0.0
  %2721 = vmatpush.msra.mxu0 0.0
  %2722 = vmatpush.msra.mxu0 0.0
  %2723 = vmatpush.msra.mxu0 0.0
  %2724 = vmatpush.msra.mxu0 0.0
  %2725 = vmatpush.msra.mxu0 0.0
  %2726 = vmatpush.msra.mxu0 0.0
  %2727 = vmatpush.msra.mxu0 0.0
  %2728 = vmatpush.msra.mxu0 0.0
  %2729 = vmatpush.msra.mxu0 0.0
  %2730 = vmatpush.msra.mxu0 0.0
  %2731 = vmatpush.msra.mxu0 0.0
  %2732 = vmatpush.msra.mxu0 %v2715
  %2733 = vmatmul.f32.gmra.mxu0 %v2703
  %v2734 = vpop.f32.mrf.mxu0
  %v2735 = vadd.f32 %v2691, %v2734
  %2736 = vmatmul.f32.gmra.mxu0 %v2706
  %v2737 = vpop.f32.mrf.mxu0
  %v2738 = vadd.f32 %v2694, %v2737
  %2739 = vmatmul.f32.gmra.mxu0 %v2709
  %v2740 = vpop.f32.mrf.mxu0
  %v2741 = vadd.f32 %v2697, %v2740
  %2742 = vmatmul.f32.gmra.mxu0 %v2712
  %v2743 = vpop.f32.mrf.mxu0
  %v2744 = vadd.f32 %v2700, %v2743
  %2745 = vdwg.mxu0
  %v2746 = vperm.slane %v17, 0
  %v2747 = vadd.f32 %v2735, %v2746
  %v2748 = vadd.f32 %v2738, %v2746
  %v2749 = vadd.f32 %v2741, %v2746
  %v2750 = vadd.f32 %v2744, %v2746
  %vm2751 = vcmp.gt.f32.partialorder %v2747, 0.0
  %vm2752 = vcmp.gt.f32.partialorder %v2748, 0.0
  %vm2753 = vcmp.gt.f32.partialorder %v2749, 0.0
  %vm2754 = vcmp.gt.f32.partialorder %v2750, 0.0
  %v2755 = vmul.f32 %v2747, 1.442695
  %v2756 = vpow.pop %v2755
  %v2757 = vmul.f32 %v2748, 1.442695
  %v2758 = vpow.pop %v2757
  %v2759 = vmul.f32 %v2749, 1.442695
  %v2760 = vpow.pop %v2759
  %v2761 = vmul.f32 %v2750, 1.442695
  %v2762 = vpow.pop %v2761
  %v2763 = vsub.f32 %v2756, 1.0
  %v2764 = vsub.f32 %v2758, 1.0
  %v2765 = vsub.f32 %v2760, 1.0
  %v2766 = vsub.f32 %v2762, 1.0
  %v2767 = vmul.f32 %v2763, 1.6732632
  %v2768 = vmul.f32 %v2764, 1.6732632
  %v2769 = vmul.f32 %v2765, 1.6732632
  %v2770 = vmul.f32 %v2766, 1.6732632
  %v2771 = vsel %vm2751, %v2747, %v2767
  %v2772 = vsel %vm2752, %v2748, %v2768
  %v2773 = vsel %vm2753, %v2749, %v2769
  %v2774 = vsel %vm2754, %v2750, %v2770
  %v2775 = vmul.f32 %v2771, 1.050701
  %v2776 = vmul.f32 %v2772, 1.050701
  %v2777 = vmul.f32 %v2773, 1.050701
  %v2778 = vmul.f32 %v2774, 1.050701
  %v2779 = vld [vmem:[%s2 + $0x20] sm:$0xff]
  %v2780 = vld [vmem:[%s2 + $0x28] sm:$0xff]
  %vm2781 = vcmask 64512
  %v2783 = vsel %vm2781, %v2776, 0
  %2785 = vmatpush.msra.mxu0 0.0
  %2786 = vmatpush.msra.mxu0 0.0
  %2787 = vmatpush.msra.mxu0 0.0
  %2788 = vmatpush.msra.mxu0 0.0
  %2789 = vmatpush.msra.mxu0 0.0
  %2790 = vmatpush.msra.mxu0 0.0
  %2791 = vmatpush.msra.mxu0 0.0
  %2792 = vmatpush.msra.mxu0 0.0
  %2793 = vmatpush.msra.mxu0 0.0
  %2794 = vmatpush.msra.mxu0 0.0
  %2795 = vmatpush.msra.mxu0 0.0
  %2796 = vmatpush.msra.mxu0 0.0
  %2797 = vmatpush.msra.mxu0 0.0
  %2798 = vmatpush.msra.mxu0 0.0
  %2799 = vmatpush.msra.mxu0 0.0
  %2800 = vmatpush.msra.mxu0 %v2780
  %2801 = vmatmul.f32.gmra.mxu0 %v2783
  %v2802 = vpop.f32.mrf.mxu0
  %v2803 = vadd.f32 0.0, %v2802
  %2804 = vdwg.mxu0
  %v2806 = vsel %vm2781, %v2775, 0
  %2808 = vmatpush.msra.mxu0 0.0
  %2809 = vmatpush.msra.mxu0 0.0
  %2810 = vmatpush.msra.mxu0 0.0
  %2811 = vmatpush.msra.mxu0 0.0
  %2812 = vmatpush.msra.mxu0 0.0
  %2813 = vmatpush.msra.mxu0 0.0
  %2814 = vmatpush.msra.mxu0 0.0
  %2815 = vmatpush.msra.mxu0 0.0
  %2816 = vmatpush.msra.mxu0 0.0
  %2817 = vmatpush.msra.mxu0 0.0
  %2818 = vmatpush.msra.mxu0 0.0
  %2819 = vmatpush.msra.mxu0 0.0
  %2820 = vmatpush.msra.mxu0 0.0
  %2821 = vmatpush.msra.mxu0 0.0
  %2822 = vmatpush.msra.mxu0 0.0
  %2823 = vmatpush.msra.mxu0 %v2779
  %2824 = vmatmul.f32.gmra.mxu0 %v2806
  %v2825 = vpop.f32.mrf.mxu0
  %v2826 = vadd.f32 %v2803, %v2825
  %2827 = vdwg.mxu0
  %v2828 = vld [vmem:[%s2 + $0x30] sm:$0xff]
  %v2830 = vsel %vm2781, %v2777, 0
  %2832 = vmatpush.msra.mxu0 0.0
  %2833 = vmatpush.msra.mxu0 0.0
  %2834 = vmatpush.msra.mxu0 0.0
  %2835 = vmatpush.msra.mxu0 0.0
  %2836 = vmatpush.msra.mxu0 0.0
  %2837 = vmatpush.msra.mxu0 0.0
  %2838 = vmatpush.msra.mxu0 0.0
  %2839 = vmatpush.msra.mxu0 0.0
  %2840 = vmatpush.msra.mxu0 0.0
  %2841 = vmatpush.msra.mxu0 0.0
  %2842 = vmatpush.msra.mxu0 0.0
  %2843 = vmatpush.msra.mxu0 0.0
  %2844 = vmatpush.msra.mxu0 0.0
  %2845 = vmatpush.msra.mxu0 0.0
  %2846 = vmatpush.msra.mxu0 0.0
  %2847 = vmatpush.msra.mxu0 %v2828
  %2848 = vmatmul.f32.gmra.mxu0 %v2830
  %v2849 = vpop.f32.mrf.mxu0
  %v2850 = vadd.f32 0.0, %v2849
  %2851 = vdwg.mxu0
  %v2852 = vadd.f32 %v2826, %v2850
  %v2853 = vld [vmem:[%s2 + $0x38] sm:$0xff]
  %v2855 = vsel %vm2781, %v2778, 0
  %2857 = vmatpush.msra.mxu0 0.0
  %2858 = vmatpush.msra.mxu0 0.0
  %2859 = vmatpush.msra.mxu0 0.0
  %2860 = vmatpush.msra.mxu0 0.0
  %2861 = vmatpush.msra.mxu0 0.0
  %2862 = vmatpush.msra.mxu0 0.0
  %2863 = vmatpush.msra.mxu0 0.0
  %2864 = vmatpush.msra.mxu0 0.0
  %2865 = vmatpush.msra.mxu0 0.0
  %2866 = vmatpush.msra.mxu0 0.0
  %2867 = vmatpush.msra.mxu0 0.0
  %2868 = vmatpush.msra.mxu0 0.0
  %2869 = vmatpush.msra.mxu0 0.0
  %2870 = vmatpush.msra.mxu0 0.0
  %2871 = vmatpush.msra.mxu0 0.0
  %2872 = vmatpush.msra.mxu0 %v2853
  %2873 = vmatmul.f32.gmra.mxu0 %v2855
  %v2874 = vpop.f32.mrf.mxu0
  %v2875 = vadd.f32 0.0, %v2874
  %2876 = vdwg.mxu0
  %v2877 = vadd.f32 %v2852, %v2875
  %v2878 = vperm.slane %v18, 0
  %v2879 = vadd.f32 %v2877, %v2878
  %v2880 = vmax.f32 %v2879, 0.0
  %v2881 = vperm.slane %v21, 0
  %vm2882 = vcmask 130048
  %v2884 = vsel %vm2882, %v2880, 0
  %2886 = vmatpush.msra.mxu0 0.0
  %2887 = vmatpush.msra.mxu0 0.0
  %2888 = vmatpush.msra.mxu0 0.0
  %2889 = vmatpush.msra.mxu0 0.0
  %2890 = vmatpush.msra.mxu0 0.0
  %2891 = vmatpush.msra.mxu0 0.0
  %2892 = vmatpush.msra.mxu0 0.0
  %2893 = vmatpush.msra.mxu0 0.0
  %2894 = vmatpush.msra.mxu0 0.0
  %2895 = vmatpush.msra.mxu0 0.0
  %2896 = vmatpush.msra.mxu0 0.0
  %2897 = vmatpush.msra.mxu0 0.0
  %2898 = vmatpush.msra.mxu0 0.0
  %2899 = vmatpush.msra.mxu0 0.0
  %2900 = vmatpush.msra.mxu0 %v20
  %2901 = vmatpush.msra.mxu0 %v19
  %2902 = vmatmul.f32.gmra.mxu0 %v2884
  %v2903 = vpop.f32.mrf.mxu0
  %v2904 = vadd.f32 %v2881, %v2903
  %2905 = vdwg.mxu0
  %v2906 = vmax.f32 %v2904, 0.0
  %v2907 = vperm.slane %v24, 0
  %v2909 = vsel %vm2882, %v2906, 0
  %2911 = vmatpush.msra.mxu0 0.0
  %2912 = vmatpush.msra.mxu0 0.0
  %2913 = vmatpush.msra.mxu0 0.0
  %2914 = vmatpush.msra.mxu0 0.0
  %2915 = vmatpush.msra.mxu0 0.0
  %2916 = vmatpush.msra.mxu0 0.0
  %2917 = vmatpush.msra.mxu0 0.0
  %2918 = vmatpush.msra.mxu0 0.0
  %2919 = vmatpush.msra.mxu0 0.0
  %2920 = vmatpush.msra.mxu0 0.0
  %2921 = vmatpush.msra.mxu0 0.0
  %2922 = vmatpush.msra.mxu0 0.0
  %2923 = vmatpush.msra.mxu0 0.0
  %2924 = vmatpush.msra.mxu0 0.0
  %2925 = vmatpush.msra.mxu0 %v23
  %2926 = vmatpush.msra.mxu0 %v22
  %2927 = vmatmul.f32.gmra.mxu0 %v2909
  %v2928 = vpop.f32.mrf.mxu0
  %v2929 = vadd.f32 %v2907, %v2928
  %2930 = vdwg.mxu0
  %vm2931 = vcmask 80896
  %v2932 = vsel %vm2931, %v2929, -inf
  %2933 = vmax.xlane.f32.xlu0 %v2932
  %v2934 = vpop.xlane.xlu0 %2933
  %v2935 = vsub.f32 %v2929, %v2934
  %v2936 = vmul.f32 %v2935, 1.442695
  %v2937 = vpow.pop %v2936
  %v2938 = vsel %vm2931, %v2937, 0.0
  %2939 = vadd.xlane.f32.xlu0 %v2938
  %v2940 = vpop.xlane.xlu0 %2939
  %v2941 = vrcp.pop %v2940
  %v2942 = vmul.f32 %v2940, %v2941
  %v2943 = vsub.f32 1.0, %v2942
  %v2944 = vmul.f32 %v2941, %v2943
  %v2945 = vadd.f32 %v2941, %v2944
  %vm2946 = vweird.f32 %v2940
  %vm2947 = vweird.f32 %v2941
  %vm2948 = vmor %vm2946, %vm2947
  %v2949 = vsel %vm2948, %v2941, %v2945
  %v2950 = vand.u32 2147483647, %v2940
  %vm2951 = vcmp.eq.f32.partialorder %v2950, 8.507059e+37
  %v2952 = vand.u32 %v2940, 2147483648
  %v2953 = vor.u32 1.1754944e-38, %v2952
  %v2954 = vsel %vm2951, %v2953, %v2949
  %v2955 = vmul.f32 %v2937, %v2954
  %2956 = vst.msk [vmem:[%s3] sm:$0xff] %vm2931, %v2955
  // Predicated region
  $region14: #{_forward_impl.1} parent=0 // pred_check
    _
  $region15: #{_forward_impl.1} parent=0 // pred_check_branch
    %2958 = sbr.rel (0) target = $region17
  $region16: #{_forward_impl.1} parent=0 // pred_region
    _
  $region17: #{_forward_impl.1} parent=0 // pred_fallthru
    _
  // Predicated region
  $region18: #{_forward_impl.1} parent=0 // pred_check
    _
  $region19: #{_forward_impl.1} parent=0 // pred_check_branch
    %2960 = sbr.rel (0) target = $region21
  $region20: #{_forward_impl.1} parent=0 // pred_region
    _
  $region21: #{_forward_impl.1} parent=0 // pred_fallthru
    _

</llo_original>
